<compile_context>
chip_gen: v7x
topology: tpu7x:2x2x1
jax: 0.10.0
libtpu: 0.0.40
codegen_flags: <defaults>
</compile_context>

<pallas_src>
import functools

import jax
import jax.numpy as jnp
import numpy as np
from jax.experimental import pallas as pl
from jax.experimental.pallas import tpu as pltpu

BN_EPS = 1e-5


# ----------------------------------------------------------------------------
# Generation-aware VMEM budgeting / tile selection helpers.
# ----------------------------------------------------------------------------
def _ceil_to(x, m):
    return ((x + m - 1) // m) * m


def _vmem_limit_bytes():
    """Scoped-VMEM request: large on 128 MiB parts (v5e/v6e), safe on v7x (64 MiB)."""
    cap = 128 * 1024 * 1024
    try:
        info_cap = int(pltpu.get_tpu_info().vmem_capacity_bytes)
        if info_cap > 0:
            cap = info_cap
    except Exception:
        pass
    return max(16 * 1024 * 1024, min(int(cap * 0.45), 64 * 1024 * 1024))


def _block_vmem_bytes(shape, itemsize):
    """Conservative VMEM footprint of one block / temporary: last dim padded to
    128 lanes, second-to-last to the dtype's sublane packing."""
    s = [int(d) for d in shape if d is not None]
    if not s:
        return itemsize
    s[-1] = _ceil_to(s[-1], 128)
    if len(s) >= 2:
        s[-2] = _ceil_to(s[-2], max(8, 32 // itemsize))
    n = 1
    for d in s:
        n *= max(d, 1)
    return n * itemsize


def _k1_step_bytes(TH, W, Cin, h):
    """Estimated per-grid-step VMEM footprint of the conv+stats kernel."""
    rows = TH * W
    b = 0
    b += 2 * _block_vmem_bytes((TH, W + 2, Cin), 2)        # x tile (double-buffered)
    b += 2 * _block_vmem_bytes((1, W + 2, Cin), 2)         # boundary row
    b += 2 * _block_vmem_bytes((6 * Cin, 2 * h), 2)        # fused weights
    b += 2 * 2 * _block_vmem_bytes((rows, h), 2)           # yf + yg output tiles
    b += 4 * _block_vmem_bytes((1, 1, 2 * h), 4)           # stats outputs
    # in-kernel temporaries: shifted row view, fused-K lhs, f32 accumulator
    b += _block_vmem_bytes((TH, W + 2, Cin), 2)
    b += _block_vmem_bytes((rows, 6 * Cin), 2)
    b += _block_vmem_bytes((rows, 2 * h), 4)
    return b


def _k2_step_bytes(TR, L):
    """Estimated per-grid-step VMEM footprint of the normalize+gate kernel."""
    b = 0
    b += 2 * 2 * _block_vmem_bytes((TR, L), 2)             # yf + yg (double-buffered)
    b += 2 * _block_vmem_bytes((TR, L), 4)                 # f32 residual
    b += 2 * _block_vmem_bytes((TR, L), 4)                 # f32 output
    b += 4 * _block_vmem_bytes((1, L), 4)                  # folded scale / shift
    b += 3 * _block_vmem_bytes((TR, L), 4)                 # f32 temporaries
    return b


def _pick_tile(n, fits, mult=8):
    """Largest divisor of n that is a multiple of `mult` (or n itself, so the
    block can equal the full dim) and whose estimated footprint fits the VMEM
    budget; falls back to the smallest legal divisor."""
    cands = [d for d in range(n, 0, -1) if n % d == 0 and (d % mult == 0 or d == n)]
    for d in cands:
        if fits(d):
            return d
    # TODO(synk): masked/padded trailing tiles for awkward (e.g. prime) sizes.
    return cands[-1]


# ----------------------------------------------------------------------------
# Kernel 1: masked 3x3 conv (kernel rows >= 2 masked -> 6 taps) as a single
# fused-K bf16 MXU matmul + BatchNorm partial statistics epilogue.
# Per grid step (one image, one row tile of TH output rows):
#   x_ref   : (TH, W+2, Cin) bf16  -- column-padded input rows r0 .. r0+TH-1
#   b_ref   : (1,  W+2, Cin) bf16  -- boundary row r0-1 (zeros for the first tile)
#   w_ref   : (6*Cin, 2h)    bf16  -- tap-fused weight matrix
#   yf_ref  : (TH*W, h) bf16, yg_ref : (TH*W, h) bf16 -- gate halves of conv out
#   sum_ref : (1, 1, 2h) f32       -- per-tile channel sums
#   m2_ref  : (1, 1, 2h) f32       -- per-tile centered sum of squares (M2)
# ----------------------------------------------------------------------------
def _masked_conv_bn_stats_kernel(x_ref, b_ref, w_ref, yf_ref, yg_ref,
                                 sum_ref, m2_ref, *, W, Cin, h):
    TH = x_ref.shape[0]
    rows = TH * W
    xt = x_ref[...]                               # ki = 1 view (rows r0 .. r0+TH-1)
    top = b_ref[...]                              # row r0-1 (zero row for the top tile)
    # ki = 0 view: same tile shifted down one row; the row entering at the top
    # comes from the boundary sideband (the previous tile's last row).
    xs = jnp.concatenate([top, xt[:TH - 1]], axis=0) if TH > 1 else top
    # Fuse all 6 unmasked taps (ki in {0,1}, kj in {0,1,2}; kernel row 2 is
    # masked away, i.e. never read) along the contraction axis -> ONE MXU
    # matmul with K = 6*Cin instead of six K = Cin matmuls + VPU adds.
    lhs = jnp.concatenate(
        [xs[:, 0:W], xs[:, 1:W + 1], xs[:, 2:W + 2],
         xt[:, 0:W], xt[:, 1:W + 1], xt[:, 2:W + 2]],
        axis=-1).reshape(rows, 6 * Cin)
    acc = jnp.dot(lhs, w_ref[...], preferred_element_type=jnp.float32)   # (rows, 2h) f32
    # BatchNorm partials: per-tile sum + centered M2 (Chan-combined in the
    # wrapper; better conditioned than a single-pass E[x^2] - E[x]^2).
    s = jnp.sum(acc, axis=0, keepdims=True)                 # (1, 2h)
    d = acc - s * (1.0 / rows)
    sum_ref[...] = s[None]
    m2_ref[...] = jnp.sum(d * d, axis=0, keepdims=True)[None]
    # Gate halves (bf16 storage; stats above use the un-rounded f32 accumulator,
    # a small documented mismatch vs. a pure-f32 reference).
    # TODO(synk): for h < 128 these stores are lane-narrow; a verified
    # (rows, h) -> (TH, W*h) in-kernel relayout would make them lane-dense
    # (the module default h = 128 is already lane-dense).
    yf_ref[...] = acc[:, :h].astype(yf_ref.dtype)
    yg_ref[...] = acc[:, h:].astype(yg_ref.dtype)


# ----------------------------------------------------------------------------
# Kernel 2: normalize (folded BN scale/shift) + Gate + residual, lane-dense.
# All row operands are (TR, W*h); scale/shift vectors are (1, W*h).
# ----------------------------------------------------------------------------
def _bn_gate_residual_kernel(yf_ref, yg_ref, x_ref, sf_ref, tf_ref, sg_ref,
                             tg_ref, o_ref):
    yf = yf_ref[...].astype(jnp.float32)          # bf16 storage, f32 math
    yg = yg_ref[...].astype(jnp.float32)
    f = jnp.tanh(yf * sf_ref[...] + tf_ref[...])
    # sigmoid(z) = 0.5 * (tanh(z / 2) + 1): one EUP transcendental per element.
    zg = yg * sg_ref[...] + tg_ref[...]
    g = 0.5 * (jnp.tanh(0.5 * zg) + 1.0)
    o_ref[...] = f * g + x_ref[...]


# ----------------------------------------------------------------------------
# Wrapper: PyTorch NCHW interface, glue in plain JAX, hot paths in Pallas.
# The MaskedConv2d kernel-row mask (rows >= k//2 + 1 zeroed) is applied
# implicitly: only kernel rows 0..k//2 are ever read.
# ----------------------------------------------------------------------------
def mask_conv_block(x_nchw, w_conv, gamma, beta, *, k_size=3, pad=1):
    N, Cin, H, W = x_nchw.shape
    Cout = w_conv.shape[0]
    h = Cin
    assert Cout == 2 * h, "MaskConvBlock expects a (2h, h, k, k) conv weight"
    assert k_size == 3 and pad == 1, "kernel written for k_size=3, pad=1"
    assert W % 8 == 0, "W must be a multiple of 8"
    # TODO(synk): general W needs trailing-column masking/padding.

    vmem_limit = _vmem_limit_bytes()
    budget = int(0.75 * vmem_limit)

    x_nhwc = jnp.transpose(x_nchw, (0, 2, 3, 1)).astype(jnp.float32)     # (N,H,W,h)
    # Single column-padded bf16 copy of the input (the only large HBM array the
    # conv kernel streams); no row padding is needed because the down-shifted
    # (ki = 0) view is rebuilt in-kernel from the boundary-row sideband.
    xp = jnp.pad(x_nhwc.astype(jnp.bfloat16),
                 ((0, 0), (0, 0), (1, 1), (0, 0)))                       # (N,H,W+2,h)

    TH = _pick_tile(H, lambda t: _k1_step_bytes(t, W, Cin, h) <= budget)
    n_h = H // TH
    # Boundary rows: input row (i*TH - 1) for each row tile (zeros for i == 0).
    if n_h > 1:
        bnd = jnp.concatenate(
            [jnp.zeros((N, 1, W + 2, Cin), xp.dtype), xp[:, TH - 1:H - 1:TH]],
            axis=1)                                                      # (N,n_h,W+2,h)
    else:
        bnd = jnp.zeros((N, 1, W + 2, Cin), xp.dtype)

    # Tap-fused weight (6*Cin, 2h); tap order (ki, kj) = (0,0..2), (1,0..2)
    # matches the in-kernel lane concat.  Kernel row 2 is never used (mask).
    w_flat = jnp.stack(
        [jnp.transpose(w_conv[:, :, ki, kj]) for ki in range(2) for kj in range(3)],
        axis=0).reshape(6 * Cin, Cout).astype(jnp.bfloat16)

    M = N * H * W
    T = N * n_h

    # --- kernel 1: conv + BN partials; grid (image, row-tile), both parallel.
    yf, yg, sums, m2s = pl.pallas_call(
        functools.partial(_masked_conv_bn_stats_kernel, W=W, Cin=Cin, h=h),
        out_shape=(jax.ShapeDtypeStruct((M, h), jnp.bfloat16),
                   jax.ShapeDtypeStruct((M, h), jnp.bfloat16),
                   jax.ShapeDtypeStruct((T, 1, Cout), jnp.float32),
                   jax.ShapeDtypeStruct((T, 1, Cout), jnp.float32)),
        grid=(N, n_h),
        in_specs=[
            pl.BlockSpec((None, TH, W + 2, Cin), lambda n, i: (n, i, 0, 0)),
            pl.BlockSpec((None, 1, W + 2, Cin), lambda n, i: (n, i, 0, 0)),
            pl.BlockSpec((6 * Cin, Cout), lambda n, i: (0, 0)),
        ],
        out_specs=(
            pl.BlockSpec((TH * W, h), lambda n, i: (n * n_h + i, 0)),
            pl.BlockSpec((TH * W, h), lambda n, i: (n * n_h + i, 0)),
            pl.BlockSpec((1, 1, Cout), lambda n, i: (n * n_h + i, 0, 0)),
            pl.BlockSpec((1, 1, Cout), lambda n, i: (n * n_h + i, 0, 0)),
        ),
        compiler_params=pltpu.CompilerParams(
            dimension_semantics=("parallel", "parallel"),
            vmem_limit_bytes=vmem_limit),
    )(xp, bnd, w_flat)

    # --- tiny Chan-style combine of the per-tile partials (a few hundred floats).
    rows_t = TH * W
    tile_sums = sums[:, 0, :]                                # (T, 2h)
    tile_m2 = m2s[:, 0, :]
    mean = jnp.sum(tile_sums, axis=0) / M                    # (2h,)
    tile_means = tile_sums / rows_t
    var = (jnp.sum(tile_m2, axis=0)
           + rows_t * jnp.sum(jnp.square(tile_means - mean[None, :]), axis=0)) / M
    var = jnp.maximum(var, 0.0)
    scale = gamma.astype(jnp.float32) * jax.lax.rsqrt(var + BN_EPS)
    shift = beta.astype(jnp.float32) - mean * scale
    L = W * h
    sf = jnp.tile(scale[:h], W).reshape(1, L)     # lane-packed: lane l -> channel l % h
    sg = jnp.tile(scale[h:], W).reshape(1, L)
    tf = jnp.tile(shift[:h], W).reshape(1, L)
    tg = jnp.tile(shift[h:], W).reshape(1, L)

    # --- kernel 2: normalize + gate + residual, lane-dense (rows=N*H, lanes=W*h).
    R = N * H
    yf2 = yf.reshape(R, L)            # free: identical row-major HBM layout
    yg2 = yg.reshape(R, L)
    x2 = x_nhwc.reshape(R, L)
    TR = _pick_tile(R, lambda t: _k2_step_bytes(t, L) <= budget)

    row_spec = pl.BlockSpec((TR, L), lambda i: (i, 0))
    vec_spec = pl.BlockSpec((1, L), lambda i: (0, 0))
    out2 = pl.pallas_call(
        _bn_gate_residual_kernel,
        out_shape=jax.ShapeDtypeStruct((R, L), jnp.float32),
        grid=(R // TR,),
        in_specs=[row_spec, row_spec, row_spec,
                  vec_spec, vec_spec, vec_spec, vec_spec],
        out_specs=row_spec,
        compiler_params=pltpu.CompilerParams(
            dimension_semantics=("parallel",),
            vmem_limit_bytes=vmem_limit),
    )(yf2, yg2, x2, sf, tf, sg, tg)

    out = out2.reshape(N, H, W, h)
    return jnp.transpose(out, (0, 3, 1, 2))


# ----------------------------------------------------------------------------
# Pure-JAX reference (mirrors the PyTorch module in training mode, f32).
# ----------------------------------------------------------------------------
def reference_forward(x_nchw, w_conv, gamma, beta):
    k = w_conv.shape[-1]
    mask = jnp.ones_like(w_conv).at[:, :, k // 2 + 1:, :].set(0.0)
    y = jax.lax.conv_general_dilated(
        x_nchw, w_conv * mask, window_strides=(1, 1), padding=((1, 1), (1, 1)),
        dimension_numbers=("NCHW", "OIHW", "NCHW"))
    mean = y.mean(axis=(0, 2, 3), keepdims=True)
    var = ((y - mean) ** 2).mean(axis=(0, 2, 3), keepdims=True)
    yn = (y - mean) * jax.lax.rsqrt(var + BN_EPS)
    yn = yn * gamma.reshape(1, -1, 1, 1) + beta.reshape(1, -1, 1, 1)
    h = x_nchw.shape[1]
    return jnp.tanh(yn[:, :h]) * jax.nn.sigmoid(yn[:, h:]) + x_nchw


if __name__ == "__main__":
    # Shapes consistent with MaskConvBlock(h): N=2, h=8 channels, 16x16 spatial.
    N, h, H, W = 2, 8, 16, 16
    k_size, pad = 3, 1

    key = jax.random.PRNGKey(0)
    kx, kw, kg, kb = jax.random.split(key, 4)
    x = jax.random.normal(kx, (N, h, H, W), dtype=jnp.float32)
    # Raw (unmasked) MaskedConv2d weight; the Pallas wrapper applies the mask
    # implicitly (never reads kernel row 2), the reference masks explicitly.
    w = 0.1 * jax.random.normal(kw, (2 * h, h, k_size, k_size), dtype=jnp.float32)
    gamma = 1.0 + 0.1 * jax.random.normal(kg, (2 * h,), dtype=jnp.float32)
    beta = 0.1 * jax.random.normal(kb, (2 * h,), dtype=jnp.float32)

    out = jax.block_until_ready(
        mask_conv_block(x, w, gamma, beta, k_size=k_size, pad=pad))
    ref = jax.block_until_ready(reference_forward(x, w, gamma, beta))

    assert out.shape == (N, h, H, W), out.shape
    # bf16 MXU operands -> looser tolerance than the pure-f32 reference.
    np.testing.assert_allclose(np.asarray(out), np.asarray(ref),
                               rtol=2e-2, atol=2e-2)
    print("KERNEL_OK")
</pallas_src>

<mosaic_0001>
module attributes {stable_mosaic.version = 11 : i64} {
  func.func @_masked_conv_bn_stats_kernel(%arg0: i32, %arg1: i32, %arg2: memref<1x16x18x8xbf16, #tpu.memory_space<vmem>>, %arg3: memref<1x1x18x8xbf16, #tpu.memory_space<vmem>>, %arg4: memref<48x16xbf16, #tpu.memory_space<vmem>>, %arg5: memref<256x8xbf16, #tpu.memory_space<vmem>>, %arg6: memref<256x8xbf16, #tpu.memory_space<vmem>>, %arg7: memref<1x1x16xf32, #tpu.memory_space<vmem>>, %arg8: memref<1x1x16xf32, #tpu.memory_space<vmem>>) attributes {dimension_semantics = [#tpu.dimension_semantics<parallel>, #tpu.dimension_semantics<parallel>], iteration_bounds = array<i64: 2, 1>, scalar_prefetch = 0 : i64, scratch_operands = 0 : i64, tpu.core_type = #tpu.core_type<tc>, window_params = [{transform_indices = @transform_0, window_bounds = array<i64: 1, 16, 18, 8>}, {transform_indices = @transform_1, window_bounds = array<i64: 1, 1, 18, 8>}, {pipeline_mode = #tpu.pipeline_mode<synchronous>, transform_indices = @transform_2, window_bounds = array<i64: 48, 16>}, {transform_indices = @transform_3, window_bounds = array<i64: 256, 8>}, {transform_indices = @transform_4, window_bounds = array<i64: 256, 8>}, {transform_indices = @transform_5, window_bounds = array<i64: 1, 1, 16>}, {transform_indices = @transform_6, window_bounds = array<i64: 1, 1, 16>}]} {
    %c0 = arith.constant 0 : index
    %c0_0 = arith.constant 0 : index
    %c0_1 = arith.constant 0 : index
    %c0_2 = arith.constant 0 : index
    %0 = vector.load %arg2[%c0, %c0_0, %c0_1, %c0_2] : memref<1x16x18x8xbf16, #tpu.memory_space<vmem>>, vector<1x16x18x8xbf16>
    %1 = vector.shape_cast %0 : vector<1x16x18x8xbf16> to vector<16x18x8xbf16>
    %c0_3 = arith.constant 0 : index
    %c0_4 = arith.constant 0 : index
    %c0_5 = arith.constant 0 : index
    %c0_6 = arith.constant 0 : index
    %2 = vector.load %arg3[%c0_3, %c0_4, %c0_5, %c0_6] : memref<1x1x18x8xbf16, #tpu.memory_space<vmem>>, vector<1x1x18x8xbf16>
    %3 = vector.shape_cast %2 : vector<1x1x18x8xbf16> to vector<1x18x8xbf16>
    %4 = vector.extract_strided_slice %1 {offsets = [0, 0, 0], sizes = [15, 18, 8], strides = [1, 1, 1]} : vector<16x18x8xbf16> to vector<15x18x8xbf16>
    %5 = tpu.concatenate %3, %4 in 0 : vector<1x18x8xbf16>, vector<15x18x8xbf16> -> vector<16x18x8xbf16>
    %6 = vector.extract_strided_slice %5 {offsets = [0, 0, 0], sizes = [16, 16, 8], strides = [1, 1, 1]} : vector<16x18x8xbf16> to vector<16x16x8xbf16>
    %7 = vector.extract_strided_slice %5 {offsets = [0, 1, 0], sizes = [16, 16, 8], strides = [1, 1, 1]} : vector<16x18x8xbf16> to vector<16x16x8xbf16>
    %8 = vector.extract_strided_slice %5 {offsets = [0, 2, 0], sizes = [16, 16, 8], strides = [1, 1, 1]} : vector<16x18x8xbf16> to vector<16x16x8xbf16>
    %9 = vector.extract_strided_slice %1 {offsets = [0, 0, 0], sizes = [16, 16, 8], strides = [1, 1, 1]} : vector<16x18x8xbf16> to vector<16x16x8xbf16>
    %10 = vector.extract_strided_slice %1 {offsets = [0, 1, 0], sizes = [16, 16, 8], strides = [1, 1, 1]} : vector<16x18x8xbf16> to vector<16x16x8xbf16>
    %11 = vector.extract_strided_slice %1 {offsets = [0, 2, 0], sizes = [16, 16, 8], strides = [1, 1, 1]} : vector<16x18x8xbf16> to vector<16x16x8xbf16>
    %12 = tpu.concatenate %6, %7, %8, %9, %10, %11 in 2 : vector<16x16x8xbf16>, vector<16x16x8xbf16>, vector<16x16x8xbf16>, vector<16x16x8xbf16>, vector<16x16x8xbf16>, vector<16x16x8xbf16> -> vector<16x16x48xbf16>
    %13 = vector.shape_cast %12 : vector<16x16x48xbf16> to vector<256x48xbf16>
    %c0_7 = arith.constant 0 : index
    %c0_8 = arith.constant 0 : index
    %14 = vector.load %arg4[%c0_7, %c0_8] : memref<48x16xbf16, #tpu.memory_space<vmem>>, vector<48x16xbf16>
    %cst = arith.constant dense<0.000000e+00> : vector<256x16xf32>
    %15 = tpu.matmul %13, %14, %cst {dimension_numbers = #tpu.dot_dimension_numbers<[1], [0], [0], [1], [0, 0, 1, 1], [], []>} : vector<256x48xbf16>, vector<48x16xbf16>, vector<256x16xf32> -> vector<256x16xf32>
    %cst_9 = arith.constant dense<0.000000e+00> : vector<16xf32>
    %16 = vector.multi_reduction <add>, %15, %cst_9 [0] : vector<256x16xf32> to vector<16xf32>
    %17 = vector.shape_cast %16 : vector<16xf32> to vector<1x16xf32>
    %cst_10 = arith.constant 3.906250e-03 : f32
    %18 = vector.broadcast %cst_10 : f32 to vector<1x16xf32>
    %19 = arith.mulf %17, %18 : vector<1x16xf32>
    %20 = vector.broadcast %19 : vector<1x16xf32> to vector<256x16xf32>
    %21 = arith.subf %15, %20 : vector<256x16xf32>
    %22 = vector.shape_cast %17 : vector<1x16xf32> to vector<1x1x16xf32>
    %c0_11 = arith.constant 0 : index
    %c0_12 = arith.constant 0 : index
    %c0_13 = arith.constant 0 : index
    %23 = vector.load %arg7[%c0_11, %c0_12, %c0_13] : memref<1x1x16xf32, #tpu.memory_space<vmem>>, vector<1x1x16xf32>
    tpu.vector_store %arg7[%c0_11, %c0_12, %c0_13], %22 {strides = array<i32>} : memref<1x1x16xf32, #tpu.memory_space<vmem>>, vector<1x1x16xf32>,
    %24 = arith.mulf %21, %21 : vector<256x16xf32>
    %cst_14 = arith.constant dense<0.000000e+00> : vector<16xf32>
    %25 = vector.multi_reduction <add>, %24, %cst_14 [0] : vector<256x16xf32> to vector<16xf32>
    %26 = vector.shape_cast %25 : vector<16xf32> to vector<1x16xf32>
    %27 = vector.shape_cast %26 : vector<1x16xf32> to vector<1x1x16xf32>
    %c0_15 = arith.constant 0 : index
    %c0_16 = arith.constant 0 : index
    %c0_17 = arith.constant 0 : index
    %28 = vector.load %arg8[%c0_15, %c0_16, %c0_17] : memref<1x1x16xf32, #tpu.memory_space<vmem>>, vector<1x1x16xf32>
    tpu.vector_store %arg8[%c0_15, %c0_16, %c0_17], %27 {strides = array<i32>} : memref<1x1x16xf32, #tpu.memory_space<vmem>>, vector<1x1x16xf32>,
    %29 = vector.extract_strided_slice %15 {offsets = [0, 0], sizes = [256, 8], strides = [1, 1]} : vector<256x16xf32> to vector<256x8xf32>
    %30 = arith.truncf %29 : vector<256x8xf32> to vector<256x8xbf16>
    %c0_18 = arith.constant 0 : index
    %c0_19 = arith.constant 0 : index
    %31 = vector.load %arg5[%c0_18, %c0_19] : memref<256x8xbf16, #tpu.memory_space<vmem>>, vector<256x8xbf16>
    tpu.vector_store %arg5[%c0_18, %c0_19], %30 {strides = array<i32>} : memref<256x8xbf16, #tpu.memory_space<vmem>>, vector<256x8xbf16>,
    %32 = vector.extract_strided_slice %15 {offsets = [0, 8], sizes = [256, 8], strides = [1, 1]} : vector<256x16xf32> to vector<256x8xf32>
    %33 = arith.truncf %32 : vector<256x8xf32> to vector<256x8xbf16>
    %c0_20 = arith.constant 0 : index
    %c0_21 = arith.constant 0 : index
    %34 = vector.load %arg6[%c0_20, %c0_21] : memref<256x8xbf16, #tpu.memory_space<vmem>>, vector<256x8xbf16>
    tpu.vector_store %arg6[%c0_20, %c0_21], %33 {strides = array<i32>} : memref<256x8xbf16, #tpu.memory_space<vmem>>, vector<256x8xbf16>,
    return
  }
  func.func @transform_0(%arg0: i32, %arg1: i32) -> (i32, i32, i32, i32) {
    %c0_i32 = arith.constant 0 : i32
    %c0_i32_0 = arith.constant 0 : i32
    %c0_i32_1 = arith.constant 0 : i32
    return %arg0, %arg1, %c0_i32, %c0_i32_0 : i32, i32, i32, i32
  }
  func.func @transform_1(%arg0: i32, %arg1: i32) -> (i32, i32, i32, i32) {
    %c0_i32 = arith.constant 0 : i32
    %c0_i32_0 = arith.constant 0 : i32
    %c0_i32_1 = arith.constant 0 : i32
    return %arg0, %arg1, %c0_i32, %c0_i32_0 : i32, i32, i32, i32
  }
  func.func @transform_2(%arg0: i32, %arg1: i32) -> (i32, i32) {
    %c0_i32 = arith.constant 0 : i32
    %c0_i32_0 = arith.constant 0 : i32
    %c0_i32_1 = arith.constant 0 : i32
    return %c0_i32, %c0_i32_0 : i32, i32
  }
  func.func @transform_3(%arg0: i32, %arg1: i32) -> (i32, i32) {
    %c1_i32 = arith.constant 1 : i32
    %0 = arith.muli %arg0, %c1_i32 : i32
    %1 = arith.addi %0, %arg1 : i32
    %c0_i32 = arith.constant 0 : i32
    %c0_i32_0 = arith.constant 0 : i32
    return %1, %c0_i32 : i32, i32
  }
  func.func @transform_4(%arg0: i32, %arg1: i32) -> (i32, i32) {
    %c1_i32 = arith.constant 1 : i32
    %0 = arith.muli %arg0, %c1_i32 : i32
    %1 = arith.addi %0, %arg1 : i32
    %c0_i32 = arith.constant 0 : i32
    %c0_i32_0 = arith.constant 0 : i32
    return %1, %c0_i32 : i32, i32
  }
  func.func @transform_5(%arg0: i32, %arg1: i32) -> (i32, i32, i32) {
    %c1_i32 = arith.constant 1 : i32
    %0 = arith.muli %arg0, %c1_i32 : i32
    %1 = arith.addi %0, %arg1 : i32
    %c0_i32 = arith.constant 0 : i32
    %c0_i32_0 = arith.constant 0 : i32
    %c0_i32_1 = arith.constant 0 : i32
    return %1, %c0_i32, %c0_i32_0 : i32, i32, i32
  }
  func.func @transform_6(%arg0: i32, %arg1: i32) -> (i32, i32, i32) {
    %c1_i32 = arith.constant 1 : i32
    %0 = arith.muli %arg0, %c1_i32 : i32
    %1 = arith.addi %0, %arg1 : i32
    %c0_i32 = arith.constant 0 : i32
    %c0_i32_0 = arith.constant 0 : i32
    %c0_i32_1 = arith.constant 0 : i32
    return %1, %c0_i32, %c0_i32_0 : i32, i32, i32
  }
}

</mosaic_0001>

<llo_original>
// kernel: tpu_custom_call.1
$region0: #{tpu_custom_call.1}
  #allocation0 [shape = 'u32[]', space=smem, size = 0x4, offset = 0x4, fixed_abs, tag = 'smem constant byte address 0x4 - core index']
  #allocation1 [shape = 'u32[144,128]{1,0:T(1,128)}', space=vmem, size = 0x12000, scoped, tag = 'internal scratch']
  %s0 = inlined_call_operand.vmem [shape: bf16[2,16,18,8], index: 0, kind: input, shape index: {}]
  %s1 = inlined_call_operand.vmem [shape: bf16[2,1,18,8], index: 1, kind: input, shape index: {}]
  %s2 = inlined_call_operand.vmem [shape: bf16[48,16], index: 2, kind: input, shape index: {}]
  %s3 = inlined_call_operand.vmem [shape: bf16[512,8], index: 3, kind: output, shape index: {0}]
  %s4 = inlined_call_operand.vmem [shape: bf16[512,8], index: 4, kind: output, shape index: {1}]
  %s5 = inlined_call_operand.hbm [shape: f32[2,1,16], index: 5, kind: output, shape index: {2}]
  %s6 = inlined_call_operand.hbm [shape: f32[2,1,16], index: 6, kind: output, shape index: {3}]
  %7 = xla_tuple %s3, %s4, %s5, %s6
  %s8 = sld [smem:[#allocation0]]
  $region69: #{tpu_custom_call.1} parent=0
    _
  %s10 = ssub.s32 1, %s8
  %s11 = scalar_select 0, %s10, %s8
  $region1: #{tpu_custom_call.1} parent=0
    #allocation2 [shape = 'u8[1024]{0}', space=vmem, size = 0x400, scoped, tag = 'output window, operand 2']
    #allocation3 [shape = 's32[2]{0}', space=sflag, size = 0x8, scoped, tag = 'scoped memory for tpu_custom_call.1']
    #allocation4 [shape = 'u8[1024]{0}', space=vmem, size = 0x400, scoped, tag = 'output window, operand 3']
    #allocation5 [shape = 's32[2]{0}', space=sflag, size = 0x8, scoped, tag = 'scoped memory for tpu_custom_call.1']
    %12 = vsyncpa [#allocation3], 0
    %s13 = scalar_lea.sflag [#allocation3], 1
    %14 = vsyncpa %s13, 0
    %15 = vsyncpa [#allocation5], 0
    %s16 = scalar_lea.sflag [#allocation5], 1
    %17 = vsyncpa %s16, 0
    loop: start=0, step=1, limit=4
    $region2: #{tpu_custom_call.1} parent=1 // loop_pre_header
      _
    $region3: #{tpu_custom_call.1} parent=1 // loop_header
      %s19 = sphi 0, %s23
      %p20 = scmp.ge.s32.totalorder %s19, 4
      %s26 = sphi 0, %s38
      %s27 = sphi 0, %s34
      %s28 = sphi 0, %s26
      %s29 = sphi 0, %s27
      %s30 = sphi 0, %s28
      %s31 = sphi 0, %s29
      %s43 = sphi 0, %s45
      %s46 = sphi 0, %s43
      %s47 = sphi 0, %s46
      %s63 = sphi 0, %s47
      %s71 = sphi 0, %s73
      %s74 = sphi 0, %s71
      %s75 = sphi 0, %s74
      %s91 = sphi 0, %s75
      %s95 = sphi 0, %s95
      %s97 = sphi 0, %s95
      %s98 = sphi 0, %s97
      %s112 = sphi 0, %s98
      %s120 = sphi 0, %s122
      %s123 = sphi 0, %s120
      %s124 = sphi 0, %s123
      %s140 = sphi 0, %s124
      %s148 = sphi 0, %s150
      %s151 = sphi 0, %s148
      %s152 = sphi 0, %s151
      %s168 = sphi 0, %s152
      %s176 = sphi 0, %s178
      %s179 = sphi 0, %s176
      %s180 = sphi 0, %s179
      %s196 = sphi 0, %s180
      %s204 = sphi 0, %s206
      %s207 = sphi 0, %s204
      %s208 = sphi 0, %s207
      %s224 = sphi 0, %s208
    $region4: #{tpu_custom_call.1} parent=1 // loop_header_branch
      %22 = sbr.rel (%p20) target = $region8
    $region5: #{tpu_custom_call.1} parent=1 // loop_body
      %s24 = ssub.s32 %s19, 1
      %s25 = ssub.s32 %s19, 2
      %s32 = sadd.s32 1, %s27
      %p33 = scmp.ge.s32.totalorder %s32, 1
      %s34 = scalar_select %p33, 0, %s32
      %s35 = sadd.s32 1, %s26
      %s36 = scalar_select %p33, %s35, %s26
      %p37 = scmp.ge.s32.totalorder %s36, 2
      %s38 = scalar_select %p37, 0, %s36
      %s39 = ssub.s32 %s26, %s38
      %s40 = ssub.s32 %s27, %s34
      %s41 = sor.u32 %s39, %s40
      %p42 = scmp.eq.s32.totalorder %s41, 0
      %s44 = sadd.s32 %s43, 1
      %s45 = scalar_select %p42, %s43, %s44
      %p48 = pneg %p42
      %p49 = scmp.eq.s32.totalorder %s19, 1
      %p50 = por %p48, %p49
      %p51 = scmp.ne.s32.totalorder %s43, %s46
      %p52 = scmp.eq.s32.totalorder %s19, 0
      %p53 = por %p51, %p52
      %p54 = scmp.ne.s32.totalorder %s43, %s46
      %p55 = scmp.eq.s32.totalorder %s24, 1
      %p56 = por %p54, %p55
      %p57 = scmp.ne.s32.totalorder %s46, %s47
      %p58 = scmp.eq.s32.totalorder %s24, 0
      %p59 = por %p57, %p58
      %p60 = scmp.ne.s32.totalorder %s46, %s47
      %p61 = scmp.eq.s32.totalorder %s25, 1
      %p62 = por %p60, %p61
      %p64 = scmp.ne.s32.totalorder %s47, %s63
      %p65 = scmp.eq.s32.totalorder %s25, 0
      %p66 = por %p64, %p65
      %s67 = ssub.s32 %s26, %s38
      %s68 = ssub.s32 %s27, %s34
      %s69 = sor.u32 %s67, %s68
      %p70 = scmp.eq.s32.totalorder %s69, 0
      %s72 = sadd.s32 %s71, 1
      %s73 = scalar_select %p70, %s71, %s72
      %p76 = pneg %p70
      %p77 = scmp.eq.s32.totalorder %s19, 1
      %p78 = por %p76, %p77
      %p79 = scmp.ne.s32.totalorder %s71, %s74
      %p80 = scmp.eq.s32.totalorder %s19, 0
      %p81 = por %p79, %p80
      %p82 = scmp.ne.s32.totalorder %s71, %s74
      %p83 = scmp.eq.s32.totalorder %s24, 1
      %p84 = por %p82, %p83
      %p85 = scmp.ne.s32.totalorder %s74, %s75
      %p86 = scmp.eq.s32.totalorder %s24, 0
      %p87 = por %p85, %p86
      %p88 = scmp.ne.s32.totalorder %s74, %s75
      %p89 = scmp.eq.s32.totalorder %s25, 1
      %p90 = por %p88, %p89
      %p92 = scmp.ne.s32.totalorder %s75, %s91
      %p93 = scmp.eq.s32.totalorder %s25, 0
      %p94 = por %p92, %p93
      %s96 = sadd.s32 %s95, 1
      %p99 = scmp.eq.s32.totalorder %s19, 1
      %p100 = scmp.ne.s32.totalorder %s95, %s97
      %p101 = scmp.eq.s32.totalorder %s19, 0
      %p102 = por %p100, %p101
      %p103 = scmp.ne.s32.totalorder %s95, %s97
      %p104 = scmp.eq.s32.totalorder %s24, 1
      %p105 = por %p103, %p104
      %p106 = scmp.ne.s32.totalorder %s97, %s98
      %p107 = scmp.eq.s32.totalorder %s24, 0
      %p108 = por %p106, %p107
      %p109 = scmp.ne.s32.totalorder %s97, %s98
      %p110 = scmp.eq.s32.totalorder %s25, 1
      %p111 = por %p109, %p110
      %p113 = scmp.ne.s32.totalorder %s98, %s112
      %p114 = scmp.eq.s32.totalorder %s25, 0
      %p115 = por %p113, %p114
      %s116 = sadd.s32 %s26, %s27
      %s117 = sadd.s32 %s38, %s34
      %s118 = ssub.s32 %s116, %s117
      %p119 = scmp.eq.s32.totalorder %s118, 0
      %s121 = sadd.s32 %s120, 1
      %s122 = scalar_select %p119, %s120, %s121
      %p125 = pneg %p119
      %p126 = scmp.eq.s32.totalorder %s19, 1
      %p127 = por %p125, %p126
      %p128 = scmp.ne.s32.totalorder %s120, %s123
      %p129 = scmp.eq.s32.totalorder %s19, 0
      %p130 = por %p128, %p129
      %p131 = scmp.ne.s32.totalorder %s120, %s123
      %p132 = scmp.eq.s32.totalorder %s24, 1
      %p133 = por %p131, %p132
      %p134 = scmp.ne.s32.totalorder %s123, %s124
      %p135 = scmp.eq.s32.totalorder %s24, 0
      %p136 = por %p134, %p135
      %p137 = scmp.ne.s32.totalorder %s123, %s124
      %p138 = scmp.eq.s32.totalorder %s25, 1
      %p139 = por %p137, %p138
      %p141 = scmp.ne.s32.totalorder %s124, %s140
      %p142 = scmp.eq.s32.totalorder %s25, 0
      %p143 = por %p141, %p142
      %s144 = sadd.s32 %s26, %s27
      %s145 = sadd.s32 %s38, %s34
      %s146 = ssub.s32 %s144, %s145
      %p147 = scmp.eq.s32.totalorder %s146, 0
      %s149 = sadd.s32 %s148, 1
      %s150 = scalar_select %p147, %s148, %s149
      %p153 = pneg %p147
      %p154 = scmp.eq.s32.totalorder %s19, 1
      %p155 = por %p153, %p154
      %p156 = scmp.ne.s32.totalorder %s148, %s151
      %p157 = scmp.eq.s32.totalorder %s19, 0
      %p158 = por %p156, %p157
      %p159 = scmp.ne.s32.totalorder %s148, %s151
      %p160 = scmp.eq.s32.totalorder %s24, 1
      %p161 = por %p159, %p160
      %p162 = scmp.ne.s32.totalorder %s151, %s152
      %p163 = scmp.eq.s32.totalorder %s24, 0
      %p164 = por %p162, %p163
      %p165 = scmp.ne.s32.totalorder %s151, %s152
      %p166 = scmp.eq.s32.totalorder %s25, 1
      %p167 = por %p165, %p166
      %p169 = scmp.ne.s32.totalorder %s152, %s168
      %p170 = scmp.eq.s32.totalorder %s25, 0
      %p171 = por %p169, %p170
      %s172 = sadd.s32 %s26, %s27
      %s173 = sadd.s32 %s38, %s34
      %s174 = ssub.s32 %s172, %s173
      %p175 = scmp.eq.s32.totalorder %s174, 0
      %s177 = sadd.s32 %s176, 1
      %s178 = scalar_select %p175, %s176, %s177
      %p181 = pneg %p175
      %p182 = scmp.eq.s32.totalorder %s19, 1
      %p183 = por %p181, %p182
      %p184 = scmp.ne.s32.totalorder %s176, %s179
      %p185 = scmp.eq.s32.totalorder %s19, 0
      %p186 = por %p184, %p185
      %p187 = scmp.ne.s32.totalorder %s176, %s179
      %p188 = scmp.eq.s32.totalorder %s24, 1
      %p189 = por %p187, %p188
      %p190 = scmp.ne.s32.totalorder %s179, %s180
      %p191 = scmp.eq.s32.totalorder %s24, 0
      %p192 = por %p190, %p191
      %p193 = scmp.ne.s32.totalorder %s179, %s180
      %p194 = scmp.eq.s32.totalorder %s25, 1
      %p195 = por %p193, %p194
      %p197 = scmp.ne.s32.totalorder %s180, %s196
      %p198 = scmp.eq.s32.totalorder %s25, 0
      %p199 = por %p197, %p198
      %s200 = sadd.s32 %s26, %s27
      %s201 = sadd.s32 %s38, %s34
      %s202 = ssub.s32 %s200, %s201
      %p203 = scmp.eq.s32.totalorder %s202, 0
      %s205 = sadd.s32 %s204, 1
      %s206 = scalar_select %p203, %s204, %s205
      %p209 = pneg %p203
      %p210 = scmp.eq.s32.totalorder %s19, 1
      %p211 = por %p209, %p210
      %p212 = scmp.ne.s32.totalorder %s204, %s207
      %p213 = scmp.eq.s32.totalorder %s19, 0
      %p214 = por %p212, %p213
      %p215 = scmp.ne.s32.totalorder %s204, %s207
      %p216 = scmp.eq.s32.totalorder %s24, 1
      %p217 = por %p215, %p216
      %p218 = scmp.ne.s32.totalorder %s207, %s208
      %p219 = scmp.eq.s32.totalorder %s24, 0
      %p220 = por %p218, %p219
      %p221 = scmp.ne.s32.totalorder %s207, %s208
      %p222 = scmp.eq.s32.totalorder %s25, 1
      %p223 = por %p221, %p222
      %p225 = scmp.ne.s32.totalorder %s208, %s224
      %p226 = scmp.eq.s32.totalorder %s25, 0
      %p227 = por %p225, %p226
      %p228 = scmp.le.s32.totalorder 1, %s19
      %p229 = scmp.lt.s32.totalorder %s19, 3
      %p230 = pnand %p228, %p229
      %p231 = pneg %p230
      // Predicated region
      $region9: #{tpu_custom_call.1} parent=5 // pred_check
        _
      $region10: #{tpu_custom_call.1} parent=5 // pred_check_branch
        %233 = sbr.rel (%p230) target = $region12
      $region11: #{tpu_custom_call.1} parent=5 // pred_region
        %s234 = ssub.s32 %s19, 1
        // Predicated region
        $region13: #{tpu_custom_call.1} parent=11 // pred_check
          %p235 = pneg %p108
        $region14: #{tpu_custom_call.1} parent=11 // pred_check_branch
          %237 = sbr.rel (%p235) target = $region16
        $region15: #{tpu_custom_call.1} parent=11 // pred_region
          _
        $region16: #{tpu_custom_call.1} parent=11 // pred_fallthru
          _
      $region12: #{tpu_custom_call.1} parent=5 // pred_fallthru
        _
      %p238 = scmp.lt.s32.totalorder %s19, 2
      // Predicated region
      $region17: #{tpu_custom_call.1} parent=5 // pred_check
        %p239 = pneg %p238
      $region18: #{tpu_custom_call.1} parent=5 // pred_check_branch
        %241 = sbr.rel (%p239) target = $region20
      $region19: #{tpu_custom_call.1} parent=5 // pred_region
        // Predicated region
        $region21: #{tpu_custom_call.1} parent=19 // pred_check
          %p242 = pneg %p53
        $region22: #{tpu_custom_call.1} parent=19 // pred_check_branch
          %244 = sbr.rel (%p242) target = $region24
        $region23: #{tpu_custom_call.1} parent=19 // pred_region
          %s245 = smul.u32 16, %s27
          %p246 = scmp.lt.s32.totalorder %s26, 1
          %s247 = scalar_select %p246, %s26, 1
          %p248 = scmp.lt.s32.totalorder %s245, 15
          %s249 = scalar_select %p248, %s245, 15
          %s250 = smul.addr %s249, 3
          %s251 = smul.addr %s247, 48
          %s252 = sadd.s32 %s250, %s251
          %s253 = smul.addr %s252, 4
          %s254 = scalar_lea.vmem %s0, %s253
          %s255 = smul.u32 16, %s27
        $region24: #{tpu_custom_call.1} parent=19 // pred_fallthru
          _
        // Predicated region
        $region25: #{tpu_custom_call.1} parent=19 // pred_check
          %p256 = pneg %p81
        $region26: #{tpu_custom_call.1} parent=19 // pred_check_branch
          %258 = sbr.rel (%p256) target = $region28
        $region27: #{tpu_custom_call.1} parent=19 // pred_region
          %p259 = scmp.lt.s32.totalorder %s26, 1
          %s260 = scalar_select %p259, %s26, 1
          %p261 = scmp.lt.s32.totalorder %s27, 0
          %s262 = scalar_select %p261, %s27, 0
          %s263 = smul.addr %s262, 3
          %s264 = smul.addr %s260, 3
          %s265 = sadd.s32 %s263, %s264
          %s266 = smul.addr %s265, 4
          %s267 = scalar_lea.vmem %s1, %s266
        $region28: #{tpu_custom_call.1} parent=19 // pred_fallthru
          _
      $region20: #{tpu_custom_call.1} parent=5 // pred_fallthru
        _
      %p268 = scmp.le.s32.totalorder 1, %s19
      %p269 = scmp.lt.s32.totalorder %s19, 3
      %p270 = pnand %p268, %p269
      %p271 = pneg %p270
      // Predicated region
      $region29: #{tpu_custom_call.1} parent=5 // pred_check
        _
      $region30: #{tpu_custom_call.1} parent=5 // pred_check_branch
        %273 = sbr.rel (%p270) target = $region32
      $region31: #{tpu_custom_call.1} parent=5 // pred_region
        %s274 = ssub.s32 %s19, 1
        %s275 = smul.u32 16, %s29
        %p276 = scmp.lt.s32.totalorder %s28, 1
        %s277 = scalar_select %p276, %s28, 1
        %p278 = scmp.lt.s32.totalorder %s275, 15
        %s279 = scalar_select %p278, %s275, 15
        %s280 = smul.addr %s279, 3
        %s281 = smul.addr %s277, 48
        %s282 = sadd.s32 %s280, %s281
        %s283 = smul.addr %s282, 4
        %s284 = scalar_lea.vmem %s0, %s283
        %p285 = pneg %p59
        %p286 = pneg %p56
        %p287 = scmp.lt.s32.totalorder %s28, 1
        %s288 = scalar_select %p287, %s28, 1
        %p289 = scmp.lt.s32.totalorder %s29, 0
        %s290 = scalar_select %p289, %s29, 0
        %s291 = smul.addr %s290, 3
        %s292 = smul.addr %s288, 3
        %s293 = sadd.s32 %s291, %s292
        %s294 = smul.addr %s293, 4
        %s295 = scalar_lea.vmem %s1, %s294
        %p296 = pneg %p87
        %p297 = pneg %p84
        %p298 = pneg %p108
        %p299 = pneg %p105
        %p300 = pneg %p136
        %p301 = pneg %p133
        %s302 = sadd.s32 %s28, %s29
        %s303 = smul.u32 32, %s302
        %p304 = scmp.lt.s32.totalorder %s303, 63
        %s305 = scalar_select %p304, %s303, 63
        %s306 = smul.addr %s305, 4
        %s307 = scalar_lea.vmem %s3, %s306
        %p308 = pneg %p164
        %p309 = pneg %p161
        %s310 = sadd.s32 %s28, %s29
        %s311 = smul.u32 32, %s310
        %p312 = scmp.lt.s32.totalorder %s311, 63
        %s313 = scalar_select %p312, %s311, 63
        %s314 = smul.addr %s313, 4
        %s315 = scalar_lea.vmem %s4, %s314
        %p316 = pneg %p192
        %p317 = pneg %p189
        %s318 = sand.u32 %s179, 1
        %s319 = scalar_lea.sflag [#allocation3], %s318
        %s320 = sand.u32 %s179, 1
        %s321 = scalar_lea.vmem [#allocation2], %s320
        %p322 = pneg %p220
        %p323 = pneg %p217
        %s324 = sand.u32 %s207, 1
        %s325 = scalar_lea.sflag [#allocation5], %s324
        %s326 = sand.u32 %s207, 1
        %s327 = scalar_lea.vmem [#allocation4], %s326
        %s328 = smul.u32 16, %s29
        %p329 = scmp.lt.s32.totalorder %s28, 1
        %s330 = scalar_select %p329, %s28, 1
        %p331 = scmp.lt.s32.totalorder %s328, 15
        %s332 = scalar_select %p331, %s328, 15
        %s333 = smul.addr %s332, 3
        %s334 = smul.addr %s330, 48
        %s335 = sadd.s32 %s333, %s334
        %s336 = smul.addr %s335, 4
        %s337 = scalar_lea.vmem %s0, %s336
        %s338 = smul.u32 16, %s29
        %p339 = scmp.lt.s32.totalorder %s28, 1
        %s340 = scalar_select %p339, %s28, 1
        %p341 = scmp.lt.s32.totalorder %s29, 0
        %s342 = scalar_select %p341, %s29, 0
        %s343 = smul.addr %s342, 3
        %s344 = smul.addr %s340, 3
        %s345 = sadd.s32 %s343, %s344
        %s346 = smul.addr %s345, 4
        %s347 = scalar_lea.vmem %s1, %s346
        %s348 = sadd.s32 %s28, %s29
        %s349 = smul.u32 32, %s348
        %p350 = scmp.lt.s32.totalorder %s349, 63
        %s351 = scalar_select %p350, %s349, 63
        %s352 = smul.addr %s351, 4
        %s353 = scalar_lea.vmem %s3, %s352
        %s354 = sadd.s32 %s28, %s29
        %s355 = smul.u32 32, %s354
        %s356 = sadd.s32 %s28, %s29
        %s357 = smul.u32 32, %s356
        %p358 = scmp.lt.s32.totalorder %s357, 63
        %s359 = scalar_select %p358, %s357, 63
        %s360 = smul.addr %s359, 4
        %s361 = scalar_lea.vmem %s4, %s360
        %s362 = sadd.s32 %s28, %s29
        %s363 = smul.u32 32, %s362
        %s364 = sadd.s32 %s28, %s29
        %s365 = sadd.s32 %s28, %s29
        %v367 = vld [vmem:[%s337] sm:$0xf]
        %v368 = vld [vmem:[%s337 + $0x4] sm:$0xf]
        %v369 = vld [vmem:[%s337 + $0x8] sm:$0x1]
        %v370 = vld [vmem:[%s337 + $0xc] sm:$0xf]
        %v371 = vld [vmem:[%s337 + $0x10] sm:$0xf]
        %v372 = vld [vmem:[%s337 + $0x14] sm:$0x1]
        %v373 = vld [vmem:[%s337 + $0x18] sm:$0xf]
        %v374 = vld [vmem:[%s337 + $0x1c] sm:$0xf]
        %v375 = vld [vmem:[%s337 + $0x20] sm:$0x1]
        %v376 = vld [vmem:[%s337 + $0x24] sm:$0xf]
        %v377 = vld [vmem:[%s337 + $0x28] sm:$0xf]
        %v378 = vld [vmem:[%s337 + $0x2c] sm:$0x1]
        %v379 = vld [vmem:[%s337 + $0x30] sm:$0xf]
        %v380 = vld [vmem:[%s337 + $0x34] sm:$0xf]
        %v381 = vld [vmem:[%s337 + $0x38] sm:$0x1]
        %v382 = vld [vmem:[%s337 + $0x3c] sm:$0xf]
        %v383 = vld [vmem:[%s337 + $0x40] sm:$0xf]
        %v384 = vld [vmem:[%s337 + $0x44] sm:$0x1]
        %v385 = vld [vmem:[%s337 + $0x48] sm:$0xf]
        %v386 = vld [vmem:[%s337 + $0x4c] sm:$0xf]
        %v387 = vld [vmem:[%s337 + $0x50] sm:$0x1]
        %v388 = vld [vmem:[%s337 + $0x54] sm:$0xf]
        %v389 = vld [vmem:[%s337 + $0x58] sm:$0xf]
        %v390 = vld [vmem:[%s337 + $0x5c] sm:$0x1]
        %v391 = vld [vmem:[%s337 + $0x60] sm:$0xf]
        %v392 = vld [vmem:[%s337 + $0x64] sm:$0xf]
        %v393 = vld [vmem:[%s337 + $0x68] sm:$0x1]
        %v394 = vld [vmem:[%s337 + $0x6c] sm:$0xf]
        %v395 = vld [vmem:[%s337 + $0x70] sm:$0xf]
        %v396 = vld [vmem:[%s337 + $0x74] sm:$0x1]
        %v397 = vld [vmem:[%s337 + $0x78] sm:$0xf]
        %v398 = vld [vmem:[%s337 + $0x7c] sm:$0xf]
        %v399 = vld [vmem:[%s337 + $0x80] sm:$0x1]
        %v400 = vld [vmem:[%s337 + $0x84] sm:$0xf]
        %v401 = vld [vmem:[%s337 + $0x88] sm:$0xf]
        %v402 = vld [vmem:[%s337 + $0x8c] sm:$0x1]
        %v403 = vld [vmem:[%s337 + $0x90] sm:$0xf]
        %v404 = vld [vmem:[%s337 + $0x94] sm:$0xf]
        %v405 = vld [vmem:[%s337 + $0x98] sm:$0x1]
        %v406 = vld [vmem:[%s337 + $0x9c] sm:$0xf]
        %v407 = vld [vmem:[%s337 + $0xa0] sm:$0xf]
        %v408 = vld [vmem:[%s337 + $0xa4] sm:$0x1]
        %v409 = vld [vmem:[%s337 + $0xa8] sm:$0xf]
        %v410 = vld [vmem:[%s337 + $0xac] sm:$0xf]
        %v411 = vld [vmem:[%s337 + $0xb0] sm:$0x1]
        %v412 = vld [vmem:[%s337 + $0xb4] sm:$0xf]
        %v413 = vld [vmem:[%s337 + $0xb8] sm:$0xf]
        %v414 = vld [vmem:[%s337 + $0xbc] sm:$0x1]
        %v415 = vld [vmem:[%s347] sm:$0xf]
        %v416 = vld [vmem:[%s347 + $0x4] sm:$0xf]
        %v417 = vld [vmem:[%s347 + $0x8] sm:$0x1]
        %v450 = vunpack.c.l.b16 %v415
        %v451 = vunpack.c.l.b16 %v416
        %v452 = vunpack.c.l.b16 %v367
        %v453 = vunpack.c.l.b16 %v368
        %v454 = vunpack.c.l.b16 %v370
        %v455 = vunpack.c.l.b16 %v371
        %v456 = vunpack.c.l.b16 %v373
        %v457 = vunpack.c.l.b16 %v374
        %v458 = vunpack.c.l.b16 %v376
        %v459 = vunpack.c.l.b16 %v377
        %v460 = vunpack.c.l.b16 %v379
        %v461 = vunpack.c.l.b16 %v380
        %v462 = vunpack.c.l.b16 %v382
        %v463 = vunpack.c.l.b16 %v383
        %v464 = vunpack.c.l.b16 %v385
        %v465 = vunpack.c.l.b16 %v386
        %v466 = vunpack.c.l.b16 %v388
        %v467 = vunpack.c.l.b16 %v389
        %v468 = vunpack.c.l.b16 %v391
        %v469 = vunpack.c.l.b16 %v392
        %v470 = vunpack.c.l.b16 %v394
        %v471 = vunpack.c.l.b16 %v395
        %v472 = vunpack.c.l.b16 %v397
        %v473 = vunpack.c.l.b16 %v398
        %v474 = vunpack.c.l.b16 %v400
        %v475 = vunpack.c.l.b16 %v401
        %v476 = vunpack.c.l.b16 %v403
        %v477 = vunpack.c.l.b16 %v404
        %v478 = vunpack.c.l.b16 %v406
        %v479 = vunpack.c.l.b16 %v407
        %v480 = vunpack.c.l.b16 %v409
        %v481 = vunpack.c.l.b16 %v410
        %v482 = vpack.c.b16 %v451, %v450
        %v483 = vpack.c.b16 %v453, %v452
        %v484 = vpack.c.b16 %v455, %v454
        %v485 = vpack.c.b16 %v457, %v456
        %v486 = vpack.c.b16 %v459, %v458
        %v487 = vpack.c.b16 %v461, %v460
        %v488 = vpack.c.b16 %v463, %v462
        %v489 = vpack.c.b16 %v465, %v464
        %v490 = vpack.c.b16 %v467, %v466
        %v491 = vpack.c.b16 %v469, %v468
        %v492 = vpack.c.b16 %v471, %v470
        %v493 = vpack.c.b16 %v473, %v472
        %v494 = vpack.c.b16 %v475, %v474
        %v495 = vpack.c.b16 %v477, %v476
        %v496 = vpack.c.b16 %v479, %v478
        %v497 = vpack.c.b16 %v481, %v480
        %v514 = vunpack.c.l.b16 %v417
        %v515 = vunpack.c.l.b16 %v369
        %v516 = vunpack.c.l.b16 %v372
        %v517 = vunpack.c.l.b16 %v375
        %v518 = vunpack.c.l.b16 %v378
        %v519 = vunpack.c.l.b16 %v381
        %v520 = vunpack.c.l.b16 %v384
        %v521 = vunpack.c.l.b16 %v387
        %v522 = vunpack.c.l.b16 %v390
        %v523 = vunpack.c.l.b16 %v393
        %v524 = vunpack.c.l.b16 %v396
        %v525 = vunpack.c.l.b16 %v399
        %v526 = vunpack.c.l.b16 %v402
        %v527 = vunpack.c.l.b16 %v405
        %v528 = vunpack.c.l.b16 %v408
        %v529 = vunpack.c.l.b16 %v411
        %v530 = vpack.c.b16 %v514, %v514
        %v531 = vpack.c.b16 %v515, %v515
        %v532 = vpack.c.b16 %v516, %v516
        %v533 = vpack.c.b16 %v517, %v517
        %v534 = vpack.c.b16 %v518, %v518
        %v535 = vpack.c.b16 %v519, %v519
        %v536 = vpack.c.b16 %v520, %v520
        %v537 = vpack.c.b16 %v521, %v521
        %v538 = vpack.c.b16 %v522, %v522
        %v539 = vpack.c.b16 %v523, %v523
        %v540 = vpack.c.b16 %v524, %v524
        %v541 = vpack.c.b16 %v525, %v525
        %v542 = vpack.c.b16 %v526, %v526
        %v543 = vpack.c.b16 %v527, %v527
        %v544 = vpack.c.b16 %v528, %v528
        %v545 = vpack.c.b16 %v529, %v529
        %vm546 = vsmask.f32 7424
        %v548 = vshrl.u32 %v482, 16
        %v550 = vshll.u32 %v482, 16
        %v552 = vrot.slane %v550, 1
        %v553 = vor.u32 %v548, %v552
        %v555 = vshll.u32 %v530, 16
        %v557 = vrot.slane %v555, 1
        %v558 = vsel %vm546, %v553, %v557
        %v560 = vshrl.u32 %v483, 16
        %v562 = vshll.u32 %v483, 16
        %v564 = vrot.slane %v562, 1
        %v565 = vor.u32 %v560, %v564
        %v567 = vshll.u32 %v531, 16
        %v569 = vrot.slane %v567, 1
        %v570 = vsel %vm546, %v565, %v569
        %v572 = vshrl.u32 %v484, 16
        %v574 = vshll.u32 %v484, 16
        %v576 = vrot.slane %v574, 1
        %v577 = vor.u32 %v572, %v576
        %v579 = vshll.u32 %v532, 16
        %v581 = vrot.slane %v579, 1
        %v582 = vsel %vm546, %v577, %v581
        %v584 = vshrl.u32 %v485, 16
        %v586 = vshll.u32 %v485, 16
        %v588 = vrot.slane %v586, 1
        %v589 = vor.u32 %v584, %v588
        %v591 = vshll.u32 %v533, 16
        %v593 = vrot.slane %v591, 1
        %v594 = vsel %vm546, %v589, %v593
        %v596 = vshrl.u32 %v486, 16
        %v598 = vshll.u32 %v486, 16
        %v600 = vrot.slane %v598, 1
        %v601 = vor.u32 %v596, %v600
        %v603 = vshll.u32 %v534, 16
        %v605 = vrot.slane %v603, 1
        %v606 = vsel %vm546, %v601, %v605
        %v608 = vshrl.u32 %v487, 16
        %v610 = vshll.u32 %v487, 16
        %v612 = vrot.slane %v610, 1
        %v613 = vor.u32 %v608, %v612
        %v615 = vshll.u32 %v535, 16
        %v617 = vrot.slane %v615, 1
        %v618 = vsel %vm546, %v613, %v617
        %v620 = vshrl.u32 %v488, 16
        %v622 = vshll.u32 %v488, 16
        %v624 = vrot.slane %v622, 1
        %v625 = vor.u32 %v620, %v624
        %v627 = vshll.u32 %v536, 16
        %v629 = vrot.slane %v627, 1
        %v630 = vsel %vm546, %v625, %v629
        %v632 = vshrl.u32 %v489, 16
        %v634 = vshll.u32 %v489, 16
        %v636 = vrot.slane %v634, 1
        %v637 = vor.u32 %v632, %v636
        %v639 = vshll.u32 %v537, 16
        %v641 = vrot.slane %v639, 1
        %v642 = vsel %vm546, %v637, %v641
        %v644 = vshrl.u32 %v490, 16
        %v646 = vshll.u32 %v490, 16
        %v648 = vrot.slane %v646, 1
        %v649 = vor.u32 %v644, %v648
        %v651 = vshll.u32 %v538, 16
        %v653 = vrot.slane %v651, 1
        %v654 = vsel %vm546, %v649, %v653
        %v656 = vshrl.u32 %v491, 16
        %v658 = vshll.u32 %v491, 16
        %v660 = vrot.slane %v658, 1
        %v661 = vor.u32 %v656, %v660
        %v663 = vshll.u32 %v539, 16
        %v665 = vrot.slane %v663, 1
        %v666 = vsel %vm546, %v661, %v665
        %v668 = vshrl.u32 %v492, 16
        %v670 = vshll.u32 %v492, 16
        %v672 = vrot.slane %v670, 1
        %v673 = vor.u32 %v668, %v672
        %v675 = vshll.u32 %v540, 16
        %v677 = vrot.slane %v675, 1
        %v678 = vsel %vm546, %v673, %v677
        %v680 = vshrl.u32 %v493, 16
        %v682 = vshll.u32 %v493, 16
        %v684 = vrot.slane %v682, 1
        %v685 = vor.u32 %v680, %v684
        %v687 = vshll.u32 %v541, 16
        %v689 = vrot.slane %v687, 1
        %v690 = vsel %vm546, %v685, %v689
        %v692 = vshrl.u32 %v494, 16
        %v694 = vshll.u32 %v494, 16
        %v696 = vrot.slane %v694, 1
        %v697 = vor.u32 %v692, %v696
        %v699 = vshll.u32 %v542, 16
        %v701 = vrot.slane %v699, 1
        %v702 = vsel %vm546, %v697, %v701
        %v704 = vshrl.u32 %v495, 16
        %v706 = vshll.u32 %v495, 16
        %v708 = vrot.slane %v706, 1
        %v709 = vor.u32 %v704, %v708
        %v711 = vshll.u32 %v543, 16
        %v713 = vrot.slane %v711, 1
        %v714 = vsel %vm546, %v709, %v713
        %v716 = vshrl.u32 %v496, 16
        %v718 = vshll.u32 %v496, 16
        %v720 = vrot.slane %v718, 1
        %v721 = vor.u32 %v716, %v720
        %v723 = vshll.u32 %v544, 16
        %v725 = vrot.slane %v723, 1
        %v726 = vsel %vm546, %v721, %v725
        %v728 = vshrl.u32 %v497, 16
        %v730 = vshll.u32 %v497, 16
        %v732 = vrot.slane %v730, 1
        %v733 = vor.u32 %v728, %v732
        %v735 = vshll.u32 %v545, 16
        %v737 = vrot.slane %v735, 1
        %v738 = vsel %vm546, %v733, %v737
        %739 = vrot.lane.b32.xlu0 %v558, 8
        %v740 = vpop.permute.xlu0 %739
        %741 = vrot.lane.b32.xlu0 %v570, 8
        %v742 = vpop.permute.xlu0 %741
        %743 = vrot.lane.b32.xlu0 %v582, 8
        %v744 = vpop.permute.xlu0 %743
        %745 = vrot.lane.b32.xlu0 %v594, 8
        %v746 = vpop.permute.xlu0 %745
        %747 = vrot.lane.b32.xlu0 %v606, 8
        %v748 = vpop.permute.xlu0 %747
        %749 = vrot.lane.b32.xlu0 %v618, 8
        %v750 = vpop.permute.xlu0 %749
        %751 = vrot.lane.b32.xlu0 %v630, 8
        %v752 = vpop.permute.xlu0 %751
        %753 = vrot.lane.b32.xlu0 %v642, 8
        %v754 = vpop.permute.xlu0 %753
        %755 = vrot.lane.b32.xlu0 %v654, 8
        %v756 = vpop.permute.xlu0 %755
        %757 = vrot.lane.b32.xlu0 %v666, 8
        %v758 = vpop.permute.xlu0 %757
        %759 = vrot.lane.b32.xlu0 %v678, 8
        %v760 = vpop.permute.xlu0 %759
        %761 = vrot.lane.b32.xlu0 %v690, 8
        %v762 = vpop.permute.xlu0 %761
        %763 = vrot.lane.b32.xlu0 %v702, 8
        %v764 = vpop.permute.xlu0 %763
        %765 = vrot.lane.b32.xlu0 %v714, 8
        %v766 = vpop.permute.xlu0 %765
        %767 = vrot.lane.b32.xlu0 %v726, 8
        %v768 = vpop.permute.xlu0 %767
        %769 = vrot.lane.b32.xlu0 %v738, 8
        %v770 = vpop.permute.xlu0 %769
        %vm771 = vcmask 1046528
        %v772 = vrot.slane %v482, 1
        %v773 = vrot.slane %v530, 1
        %v774 = vsel %vm771, %v772, %v773
        %v775 = vrot.slane %v483, 1
        %v776 = vrot.slane %v531, 1
        %v777 = vsel %vm771, %v775, %v776
        %v778 = vrot.slane %v484, 1
        %v779 = vrot.slane %v532, 1
        %v780 = vsel %vm771, %v778, %v779
        %v781 = vrot.slane %v485, 1
        %v782 = vrot.slane %v533, 1
        %v783 = vsel %vm771, %v781, %v782
        %v784 = vrot.slane %v486, 1
        %v785 = vrot.slane %v534, 1
        %v786 = vsel %vm771, %v784, %v785
        %v787 = vrot.slane %v487, 1
        %v788 = vrot.slane %v535, 1
        %v789 = vsel %vm771, %v787, %v788
        %v790 = vrot.slane %v488, 1
        %v791 = vrot.slane %v536, 1
        %v792 = vsel %vm771, %v790, %v791
        %v793 = vrot.slane %v489, 1
        %v794 = vrot.slane %v537, 1
        %v795 = vsel %vm771, %v793, %v794
        %v796 = vrot.slane %v490, 1
        %v797 = vrot.slane %v538, 1
        %v798 = vsel %vm771, %v796, %v797
        %v799 = vrot.slane %v491, 1
        %v800 = vrot.slane %v539, 1
        %v801 = vsel %vm771, %v799, %v800
        %v802 = vrot.slane %v492, 1
        %v803 = vrot.slane %v540, 1
        %v804 = vsel %vm771, %v802, %v803
        %v805 = vrot.slane %v493, 1
        %v806 = vrot.slane %v541, 1
        %v807 = vsel %vm771, %v805, %v806
        %v808 = vrot.slane %v494, 1
        %v809 = vrot.slane %v542, 1
        %v810 = vsel %vm771, %v808, %v809
        %v811 = vrot.slane %v495, 1
        %v812 = vrot.slane %v543, 1
        %v813 = vsel %vm771, %v811, %v812
        %v814 = vrot.slane %v496, 1
        %v815 = vrot.slane %v544, 1
        %v816 = vsel %vm771, %v814, %v815
        %v817 = vrot.slane %v497, 1
        %v818 = vrot.slane %v545, 1
        %v819 = vsel %vm771, %v817, %v818
        %820 = vrot.lane.b32.xlu0 %v774, 16
        %v821 = vpop.permute.xlu0 %820
        %822 = vrot.lane.b32.xlu0 %v777, 16
        %v823 = vpop.permute.xlu0 %822
        %824 = vrot.lane.b32.xlu0 %v780, 16
        %v825 = vpop.permute.xlu0 %824
        %826 = vrot.lane.b32.xlu0 %v783, 16
        %v827 = vpop.permute.xlu0 %826
        %828 = vrot.lane.b32.xlu0 %v786, 16
        %v829 = vpop.permute.xlu0 %828
        %830 = vrot.lane.b32.xlu0 %v789, 16
        %v831 = vpop.permute.xlu0 %830
        %832 = vrot.lane.b32.xlu0 %v792, 16
        %v833 = vpop.permute.xlu0 %832
        %834 = vrot.lane.b32.xlu0 %v795, 16
        %v835 = vpop.permute.xlu0 %834
        %836 = vrot.lane.b32.xlu0 %v798, 16
        %v837 = vpop.permute.xlu0 %836
        %838 = vrot.lane.b32.xlu0 %v801, 16
        %v839 = vpop.permute.xlu0 %838
        %840 = vrot.lane.b32.xlu0 %v804, 16
        %v841 = vpop.permute.xlu0 %840
        %842 = vrot.lane.b32.xlu0 %v807, 16
        %v843 = vpop.permute.xlu0 %842
        %844 = vrot.lane.b32.xlu0 %v810, 16
        %v845 = vpop.permute.xlu0 %844
        %846 = vrot.lane.b32.xlu0 %v813, 16
        %v847 = vpop.permute.xlu0 %846
        %848 = vrot.lane.b32.xlu0 %v816, 16
        %v849 = vpop.permute.xlu0 %848
        %850 = vrot.lane.b32.xlu0 %v819, 16
        %v851 = vpop.permute.xlu0 %850
        %v854 = vunpack.c.l.b16 %v412
        %v855 = vunpack.c.l.b16 %v413
        %v856 = vpack.c.b16 %v855, %v854
        %857 = vrot.lane.b32.xlu0 %v483, 24
        %v858 = vpop.permute.xlu0 %857
        %859 = vrot.lane.b32.xlu0 %v484, 24
        %v860 = vpop.permute.xlu0 %859
        %861 = vrot.lane.b32.xlu0 %v485, 24
        %v862 = vpop.permute.xlu0 %861
        %863 = vrot.lane.b32.xlu0 %v486, 24
        %v864 = vpop.permute.xlu0 %863
        %865 = vrot.lane.b32.xlu0 %v487, 24
        %v866 = vpop.permute.xlu0 %865
        %867 = vrot.lane.b32.xlu0 %v488, 24
        %v868 = vpop.permute.xlu0 %867
        %869 = vrot.lane.b32.xlu0 %v489, 24
        %v870 = vpop.permute.xlu0 %869
        %871 = vrot.lane.b32.xlu0 %v490, 24
        %v872 = vpop.permute.xlu0 %871
        %873 = vrot.lane.b32.xlu0 %v491, 24
        %v874 = vpop.permute.xlu0 %873
        %875 = vrot.lane.b32.xlu0 %v492, 24
        %v876 = vpop.permute.xlu0 %875
        %877 = vrot.lane.b32.xlu0 %v493, 24
        %v878 = vpop.permute.xlu0 %877
        %879 = vrot.lane.b32.xlu0 %v494, 24
        %v880 = vpop.permute.xlu0 %879
        %881 = vrot.lane.b32.xlu0 %v495, 24
        %v882 = vpop.permute.xlu0 %881
        %883 = vrot.lane.b32.xlu0 %v496, 24
        %v884 = vpop.permute.xlu0 %883
        %885 = vrot.lane.b32.xlu0 %v497, 24
        %v886 = vpop.permute.xlu0 %885
        %887 = vrot.lane.b32.xlu0 %v856, 24
        %v888 = vpop.permute.xlu0 %887
        %v890 = vunpack.c.l.b16 %v414
        %v891 = vpack.c.b16 %v890, %v890
        %v893 = vshrl.u32 %v856, 16
        %v895 = vshll.u32 %v856, 16
        %v897 = vrot.slane %v895, 1
        %v898 = vor.u32 %v893, %v897
        %v900 = vshll.u32 %v891, 16
        %v902 = vrot.slane %v900, 1
        %v903 = vsel %vm546, %v898, %v902
        %904 = vrot.lane.b32.xlu0 %v570, 32
        %v905 = vpop.permute.xlu0 %904
        %906 = vrot.lane.b32.xlu0 %v582, 32
        %v907 = vpop.permute.xlu0 %906
        %908 = vrot.lane.b32.xlu0 %v594, 32
        %v909 = vpop.permute.xlu0 %908
        %910 = vrot.lane.b32.xlu0 %v606, 32
        %v911 = vpop.permute.xlu0 %910
        %912 = vrot.lane.b32.xlu0 %v618, 32
        %v913 = vpop.permute.xlu0 %912
        %914 = vrot.lane.b32.xlu0 %v630, 32
        %v915 = vpop.permute.xlu0 %914
        %916 = vrot.lane.b32.xlu0 %v642, 32
        %v917 = vpop.permute.xlu0 %916
        %918 = vrot.lane.b32.xlu0 %v654, 32
        %v919 = vpop.permute.xlu0 %918
        %920 = vrot.lane.b32.xlu0 %v666, 32
        %v921 = vpop.permute.xlu0 %920
        %922 = vrot.lane.b32.xlu0 %v678, 32
        %v923 = vpop.permute.xlu0 %922
        %924 = vrot.lane.b32.xlu0 %v690, 32
        %v925 = vpop.permute.xlu0 %924
        %926 = vrot.lane.b32.xlu0 %v702, 32
        %v927 = vpop.permute.xlu0 %926
        %928 = vrot.lane.b32.xlu0 %v714, 32
        %v929 = vpop.permute.xlu0 %928
        %930 = vrot.lane.b32.xlu0 %v726, 32
        %v931 = vpop.permute.xlu0 %930
        %932 = vrot.lane.b32.xlu0 %v738, 32
        %v933 = vpop.permute.xlu0 %932
        %934 = vrot.lane.b32.xlu0 %v903, 32
        %v935 = vpop.permute.xlu0 %934
        %v936 = vrot.slane %v856, 1
        %v937 = vrot.slane %v891, 1
        %v938 = vsel %vm771, %v936, %v937
        %939 = vrot.lane.b32.xlu0 %v777, 40
        %v940 = vpop.permute.xlu0 %939
        %941 = vrot.lane.b32.xlu0 %v780, 40
        %v942 = vpop.permute.xlu0 %941
        %943 = vrot.lane.b32.xlu0 %v783, 40
        %v944 = vpop.permute.xlu0 %943
        %945 = vrot.lane.b32.xlu0 %v786, 40
        %v946 = vpop.permute.xlu0 %945
        %947 = vrot.lane.b32.xlu0 %v789, 40
        %v948 = vpop.permute.xlu0 %947
        %949 = vrot.lane.b32.xlu0 %v792, 40
        %v950 = vpop.permute.xlu0 %949
        %951 = vrot.lane.b32.xlu0 %v795, 40
        %v952 = vpop.permute.xlu0 %951
        %953 = vrot.lane.b32.xlu0 %v798, 40
        %v954 = vpop.permute.xlu0 %953
        %955 = vrot.lane.b32.xlu0 %v801, 40
        %v956 = vpop.permute.xlu0 %955
        %957 = vrot.lane.b32.xlu0 %v804, 40
        %v958 = vpop.permute.xlu0 %957
        %959 = vrot.lane.b32.xlu0 %v807, 40
        %v960 = vpop.permute.xlu0 %959
        %961 = vrot.lane.b32.xlu0 %v810, 40
        %v962 = vpop.permute.xlu0 %961
        %963 = vrot.lane.b32.xlu0 %v813, 40
        %v964 = vpop.permute.xlu0 %963
        %965 = vrot.lane.b32.xlu0 %v816, 40
        %v966 = vpop.permute.xlu0 %965
        %967 = vrot.lane.b32.xlu0 %v819, 40
        %v968 = vpop.permute.xlu0 %967
        %969 = vrot.lane.b32.xlu0 %v938, 40
        %v970 = vpop.permute.xlu0 %969
        %vm971 = vcmask 64512
        %v973 = vsel %vm971, %v482, %v740
        %v975 = vsel %vm971, %v483, %v742
        %v977 = vsel %vm971, %v484, %v744
        %v979 = vsel %vm971, %v485, %v746
        %v981 = vsel %vm971, %v486, %v748
        %v983 = vsel %vm971, %v487, %v750
        %v985 = vsel %vm971, %v488, %v752
        %v987 = vsel %vm971, %v489, %v754
        %v989 = vsel %vm971, %v490, %v756
        %v991 = vsel %vm971, %v491, %v758
        %v993 = vsel %vm971, %v492, %v760
        %v995 = vsel %vm971, %v493, %v762
        %v997 = vsel %vm971, %v494, %v764
        %v999 = vsel %vm971, %v495, %v766
        %v1001 = vsel %vm971, %v496, %v768
        %v1003 = vsel %vm971, %v497, %v770
        %vm1004 = vcmask 130048
        %v1006 = vsel %vm1004, %v973, %v821
        %v1008 = vsel %vm1004, %v975, %v823
        %v1010 = vsel %vm1004, %v977, %v825
        %v1012 = vsel %vm1004, %v979, %v827
        %v1014 = vsel %vm1004, %v981, %v829
        %v1016 = vsel %vm1004, %v983, %v831
        %v1018 = vsel %vm1004, %v985, %v833
        %v1020 = vsel %vm1004, %v987, %v835
        %v1022 = vsel %vm1004, %v989, %v837
        %v1024 = vsel %vm1004, %v991, %v839
        %v1026 = vsel %vm1004, %v993, %v841
        %v1028 = vsel %vm1004, %v995, %v843
        %v1030 = vsel %vm1004, %v997, %v845
        %v1032 = vsel %vm1004, %v999, %v847
        %v1034 = vsel %vm1004, %v1001, %v849
        %v1036 = vsel %vm1004, %v1003, %v851
        %vm1037 = vcmask 195584
        %v1039 = vsel %vm1037, %v1006, %v858
        %v1041 = vsel %vm1037, %v1008, %v860
        %v1043 = vsel %vm1037, %v1010, %v862
        %v1045 = vsel %vm1037, %v1012, %v864
        %v1047 = vsel %vm1037, %v1014, %v866
        %v1049 = vsel %vm1037, %v1016, %v868
        %v1051 = vsel %vm1037, %v1018, %v870
        %v1053 = vsel %vm1037, %v1020, %v872
        %v1055 = vsel %vm1037, %v1022, %v874
        %v1057 = vsel %vm1037, %v1024, %v876
        %v1059 = vsel %vm1037, %v1026, %v878
        %v1061 = vsel %vm1037, %v1028, %v880
        %v1063 = vsel %vm1037, %v1030, %v882
        %v1065 = vsel %vm1037, %v1032, %v884
        %v1067 = vsel %vm1037, %v1034, %v886
        %v1069 = vsel %vm1037, %v1036, %v888
        %vm1070 = vcmask 261120
        %v1072 = vsel %vm1070, %v1039, %v905
        %v1074 = vsel %vm1070, %v1041, %v907
        %v1076 = vsel %vm1070, %v1043, %v909
        %v1078 = vsel %vm1070, %v1045, %v911
        %v1080 = vsel %vm1070, %v1047, %v913
        %v1082 = vsel %vm1070, %v1049, %v915
        %v1084 = vsel %vm1070, %v1051, %v917
        %v1086 = vsel %vm1070, %v1053, %v919
        %v1088 = vsel %vm1070, %v1055, %v921
        %v1090 = vsel %vm1070, %v1057, %v923
        %v1092 = vsel %vm1070, %v1059, %v925
        %v1094 = vsel %vm1070, %v1061, %v927
        %v1096 = vsel %vm1070, %v1063, %v929
        %v1098 = vsel %vm1070, %v1065, %v931
        %v1100 = vsel %vm1070, %v1067, %v933
        %v1102 = vsel %vm1070, %v1069, %v935
        %vm1103 = vcmask 326656
        %v1105 = vsel %vm1103, %v1072, %v940
        %v1107 = vsel %vm1103, %v1074, %v942
        %v1109 = vsel %vm1103, %v1076, %v944
        %v1111 = vsel %vm1103, %v1078, %v946
        %v1113 = vsel %vm1103, %v1080, %v948
        %v1115 = vsel %vm1103, %v1082, %v950
        %v1117 = vsel %vm1103, %v1084, %v952
        %v1119 = vsel %vm1103, %v1086, %v954
        %v1121 = vsel %vm1103, %v1088, %v956
        %v1123 = vsel %vm1103, %v1090, %v958
        %v1125 = vsel %vm1103, %v1092, %v960
        %v1127 = vsel %vm1103, %v1094, %v962
        %v1129 = vsel %vm1103, %v1096, %v964
        %v1131 = vsel %vm1103, %v1098, %v966
        %v1133 = vsel %vm1103, %v1100, %v968
        %v1135 = vsel %vm1103, %v1102, %v970
        %v1136 = vld [vmem:[%s2] sm:$0xf]
        %v1137 = vld [vmem:[%s2 + $0x4] sm:$0xf]
        %v1138 = vld [vmem:[%s2 + $0x8] sm:$0xf]
        %v1139 = vld [vmem:[%s2 + $0xc] sm:$0xf]
        %v1140 = vld [vmem:[%s2 + $0x10] sm:$0xf]
        %v1141 = vld [vmem:[%s2 + $0x14] sm:$0xf]
        %v1148 = vunpack.c.l.b16 %v1136
        %v1149 = vunpack.c.l.b16 %v1137
        %v1150 = vunpack.c.l.b16 %v1138
        %v1151 = vunpack.c.l.b16 %v1139
        %v1152 = vunpack.c.l.b16 %v1140
        %v1153 = vunpack.c.l.b16 %v1141
        %v1154 = vpack.c.b16 %v1149, %v1148
        %v1155 = vpack.c.b16 %v1151, %v1150
        %v1156 = vpack.c.b16 %v1153, %v1152
        %vm1160 = vcmask 392192
        %v1161 = vsel %vm1160, %v1105, 0
        %v1163 = vsel %vm1160, %v1107, 0
        %v1165 = vsel %vm1160, %v1109, 0
        %v1167 = vsel %vm1160, %v1111, 0
        %v1169 = vsel %vm1160, %v1113, 0
        %v1171 = vsel %vm1160, %v1115, 0
        %v1173 = vsel %vm1160, %v1117, 0
        %v1175 = vsel %vm1160, %v1119, 0
        %v1177 = vsel %vm1160, %v1121, 0
        %v1179 = vsel %vm1160, %v1123, 0
        %v1181 = vsel %vm1160, %v1125, 0
        %v1183 = vsel %vm1160, %v1127, 0
        %v1185 = vsel %vm1160, %v1129, 0
        %v1187 = vsel %vm1160, %v1131, 0
        %v1189 = vsel %vm1160, %v1133, 0
        %v1191 = vsel %vm1160, %v1135, 0
        %1193 = vmatprep.subr.bf16.mxu0 0
        %1194 = vmatpush1.bf16.msra.mxu0 %v1154
        %1195 = vmatprep.subr.bf16.mxu0 0
        %1196 = vmatpush1.bf16.msra.mxu0 %v1155
        %1197 = vmatprep.subr.bf16.mxu0 0
        %1198 = vmatpush1.bf16.msra.mxu0 %v1156
        %1199 = vmatprep.subr.bf16.mxu0 0
        %1200 = vmatpush1.bf16.msra.mxu0 0
        %1201 = vmatprep.subr.bf16.mxu0 0
        %1202 = vmatpush1.bf16.msra.mxu0 0
        %1203 = vmatprep.subr.bf16.mxu0 0
        %1204 = vmatpush1.bf16.msra.mxu0 0
        %1205 = vmatprep.subr.bf16.mxu0 0
        %1206 = vmatpush1.bf16.msra.mxu0 0
        %1207 = vmatprep.subr.bf16.mxu0 0
        %1208 = vmatpush1.bf16.msra.mxu0 0
        %1209 = vmatprep.subr.bf16.mxu0 0
        %1210 = vmatpush1.bf16.msra.mxu0 0
        %1211 = vmatprep.subr.bf16.mxu0 0
        %1212 = vmatpush1.bf16.msra.mxu0 0
        %1213 = vmatprep.subr.bf16.mxu0 0
        %1214 = vmatpush1.bf16.msra.mxu0 0
        %1215 = vmatprep.subr.bf16.mxu0 0
        %1216 = vmatpush1.bf16.msra.mxu0 0
        %1217 = vmatprep.subr.bf16.mxu0 0
        %1218 = vmatpush1.bf16.msra.mxu0 0
        %1219 = vmatprep.subr.bf16.mxu0 0
        %1220 = vmatpush1.bf16.msra.mxu0 0
        %1221 = vmatprep.subr.bf16.mxu0 0
        %1222 = vmatpush1.bf16.msra.mxu0 0
        %1223 = vmatprep.subr.bf16.mxu0 0
        %1224 = vmatpush1.bf16.msra.mxu0 0
        %1225 = vmatprep.mubr.bf16.mxu0 0
        %1226 = vmatmul.mubr.bf16.gmra.mrb[0].mxu0 %v1161
        %v1227 = vpop.f32.mrb[0].mxu0
        %v1228 = vadd.f32 0.0, %v1227
        %v1229 = vpop.f32.mrb[0].mxu0
        %v1230 = vpop.f32.mrb[0].mxu0
        %v1231 = vadd.f32 0.0, %v1230
        %v1232 = vpop.f32.mrb[0].mxu0
        %1233 = vmatprep.mubr.bf16.mxu0 0
        %1234 = vmatmul.mubr.bf16.gmra.mrb[0].mxu0 %v1163
        %v1235 = vpop.f32.mrb[0].mxu0
        %v1236 = vadd.f32 0.0, %v1235
        %v1237 = vpop.f32.mrb[0].mxu0
        %v1238 = vpop.f32.mrb[0].mxu0
        %v1239 = vadd.f32 0.0, %v1238
        %v1240 = vpop.f32.mrb[0].mxu0
        %1241 = vmatprep.mubr.bf16.mxu0 0
        %1242 = vmatmul.mubr.bf16.gmra.mrb[0].mxu0 %v1165
        %v1243 = vpop.f32.mrb[0].mxu0
        %v1244 = vadd.f32 0.0, %v1243
        %v1245 = vpop.f32.mrb[0].mxu0
        %v1246 = vpop.f32.mrb[0].mxu0
        %v1247 = vadd.f32 0.0, %v1246
        %v1248 = vpop.f32.mrb[0].mxu0
        %1249 = vmatprep.mubr.bf16.mxu0 0
        %1250 = vmatmul.mubr.bf16.gmra.mrb[0].mxu0 %v1167
        %v1251 = vpop.f32.mrb[0].mxu0
        %v1252 = vadd.f32 0.0, %v1251
        %v1253 = vpop.f32.mrb[0].mxu0
        %v1254 = vpop.f32.mrb[0].mxu0
        %v1255 = vadd.f32 0.0, %v1254
        %v1256 = vpop.f32.mrb[0].mxu0
        %1257 = vmatprep.mubr.bf16.mxu0 0
        %1258 = vmatmul.mubr.bf16.gmra.mrb[0].mxu0 %v1169
        %v1259 = vpop.f32.mrb[0].mxu0
        %v1260 = vadd.f32 0.0, %v1259
        %v1261 = vpop.f32.mrb[0].mxu0
        %v1262 = vpop.f32.mrb[0].mxu0
        %v1263 = vadd.f32 0.0, %v1262
        %v1264 = vpop.f32.mrb[0].mxu0
        %1265 = vmatprep.mubr.bf16.mxu0 0
        %1266 = vmatmul.mubr.bf16.gmra.mrb[0].mxu0 %v1171
        %v1267 = vpop.f32.mrb[0].mxu0
        %v1268 = vadd.f32 0.0, %v1267
        %v1269 = vpop.f32.mrb[0].mxu0
        %v1270 = vpop.f32.mrb[0].mxu0
        %v1271 = vadd.f32 0.0, %v1270
        %v1272 = vpop.f32.mrb[0].mxu0
        %1273 = vmatprep.mubr.bf16.mxu0 0
        %1274 = vmatmul.mubr.bf16.gmra.mrb[0].mxu0 %v1173
        %v1275 = vpop.f32.mrb[0].mxu0
        %v1276 = vadd.f32 0.0, %v1275
        %v1277 = vpop.f32.mrb[0].mxu0
        %v1278 = vpop.f32.mrb[0].mxu0
        %v1279 = vadd.f32 0.0, %v1278
        %v1280 = vpop.f32.mrb[0].mxu0
        %1281 = vmatprep.mubr.bf16.mxu0 0
        %1282 = vmatmul.mubr.bf16.gmra.mrb[0].mxu0 %v1175
        %v1283 = vpop.f32.mrb[0].mxu0
        %v1284 = vadd.f32 0.0, %v1283
        %v1285 = vpop.f32.mrb[0].mxu0
        %v1286 = vpop.f32.mrb[0].mxu0
        %v1287 = vadd.f32 0.0, %v1286
        %v1288 = vpop.f32.mrb[0].mxu0
        %1289 = vmatprep.mubr.bf16.mxu0 0
        %1290 = vmatmul.mubr.bf16.gmra.mrb[0].mxu0 %v1177
        %v1291 = vpop.f32.mrb[0].mxu0
        %v1292 = vadd.f32 0.0, %v1291
        %v1293 = vpop.f32.mrb[0].mxu0
        %v1294 = vpop.f32.mrb[0].mxu0
        %v1295 = vadd.f32 0.0, %v1294
        %v1296 = vpop.f32.mrb[0].mxu0
        %1297 = vmatprep.mubr.bf16.mxu0 0
        %1298 = vmatmul.mubr.bf16.gmra.mrb[0].mxu0 %v1179
        %v1299 = vpop.f32.mrb[0].mxu0
        %v1300 = vadd.f32 0.0, %v1299
        %v1301 = vpop.f32.mrb[0].mxu0
        %v1302 = vpop.f32.mrb[0].mxu0
        %v1303 = vadd.f32 0.0, %v1302
        %v1304 = vpop.f32.mrb[0].mxu0
        %1305 = vmatprep.mubr.bf16.mxu0 0
        %1306 = vmatmul.mubr.bf16.gmra.mrb[0].mxu0 %v1181
        %v1307 = vpop.f32.mrb[0].mxu0
        %v1308 = vadd.f32 0.0, %v1307
        %v1309 = vpop.f32.mrb[0].mxu0
        %v1310 = vpop.f32.mrb[0].mxu0
        %v1311 = vadd.f32 0.0, %v1310
        %v1312 = vpop.f32.mrb[0].mxu0
        %1313 = vmatprep.mubr.bf16.mxu0 0
        %1314 = vmatmul.mubr.bf16.gmra.mrb[0].mxu0 %v1183
        %v1315 = vpop.f32.mrb[0].mxu0
        %v1316 = vadd.f32 0.0, %v1315
        %v1317 = vpop.f32.mrb[0].mxu0
        %v1318 = vpop.f32.mrb[0].mxu0
        %v1319 = vadd.f32 0.0, %v1318
        %v1320 = vpop.f32.mrb[0].mxu0
        %1321 = vmatprep.mubr.bf16.mxu0 0
        %1322 = vmatmul.mubr.bf16.gmra.mrb[0].mxu0 %v1185
        %v1323 = vpop.f32.mrb[0].mxu0
        %v1324 = vadd.f32 0.0, %v1323
        %v1325 = vpop.f32.mrb[0].mxu0
        %v1326 = vpop.f32.mrb[0].mxu0
        %v1327 = vadd.f32 0.0, %v1326
        %v1328 = vpop.f32.mrb[0].mxu0
        %1329 = vmatprep.mubr.bf16.mxu0 0
        %1330 = vmatmul.mubr.bf16.gmra.mrb[0].mxu0 %v1187
        %v1331 = vpop.f32.mrb[0].mxu0
        %v1332 = vadd.f32 0.0, %v1331
        %v1333 = vpop.f32.mrb[0].mxu0
        %v1334 = vpop.f32.mrb[0].mxu0
        %v1335 = vadd.f32 0.0, %v1334
        %v1336 = vpop.f32.mrb[0].mxu0
        %1337 = vmatprep.mubr.bf16.mxu0 0
        %1338 = vmatmul.mubr.bf16.gmra.mrb[0].mxu0 %v1189
        %v1339 = vpop.f32.mrb[0].mxu0
        %v1340 = vadd.f32 0.0, %v1339
        %v1341 = vpop.f32.mrb[0].mxu0
        %v1342 = vpop.f32.mrb[0].mxu0
        %v1343 = vadd.f32 0.0, %v1342
        %v1344 = vpop.f32.mrb[0].mxu0
        %1345 = vmatprep.mubr.bf16.mxu0 0
        %1346 = vmatmul.mubr.bf16.gmra.mrb[0].mxu0 %v1191
        %v1347 = vpop.f32.mrb[0].mxu0
        %v1348 = vadd.f32 0.0, %v1347
        %v1349 = vpop.f32.mrb[0].mxu0
        %v1350 = vpop.f32.mrb[0].mxu0
        %v1351 = vadd.f32 0.0, %v1350
        %v1352 = vpop.f32.mrb[0].mxu0
        %1353 = vdwg.mxu0
        %v1354 = vsel %vm1004, %v1228, 0.0
        %v1355 = vsel %vm1004, %v1231, 0.0
        %v1356 = vadd.f32 %v1354, %v1355
        %v1357 = vsel %vm1004, %v1236, 0.0
        %v1358 = vadd.f32 %v1356, %v1357
        %v1359 = vsel %vm1004, %v1239, 0.0
        %v1360 = vadd.f32 %v1358, %v1359
        %v1361 = vsel %vm1004, %v1244, 0.0
        %v1362 = vadd.f32 %v1360, %v1361
        %v1363 = vsel %vm1004, %v1247, 0.0
        %v1364 = vadd.f32 %v1362, %v1363
        %v1365 = vsel %vm1004, %v1252, 0.0
        %v1366 = vadd.f32 %v1364, %v1365
        %v1367 = vsel %vm1004, %v1255, 0.0
        %v1368 = vadd.f32 %v1366, %v1367
        %v1369 = vsel %vm1004, %v1260, 0.0
        %v1370 = vadd.f32 %v1368, %v1369
        %v1371 = vsel %vm1004, %v1263, 0.0
        %v1372 = vadd.f32 %v1370, %v1371
        %v1373 = vsel %vm1004, %v1268, 0.0
        %v1374 = vadd.f32 %v1372, %v1373
        %v1375 = vsel %vm1004, %v1271, 0.0
        %v1376 = vadd.f32 %v1374, %v1375
        %v1377 = vsel %vm1004, %v1276, 0.0
        %v1378 = vadd.f32 %v1376, %v1377
        %v1379 = vsel %vm1004, %v1279, 0.0
        %v1380 = vadd.f32 %v1378, %v1379
        %v1381 = vsel %vm1004, %v1284, 0.0
        %v1382 = vadd.f32 %v1380, %v1381
        %v1383 = vsel %vm1004, %v1287, 0.0
        %v1384 = vadd.f32 %v1382, %v1383
        %v1385 = vsel %vm1004, %v1292, 0.0
        %v1386 = vadd.f32 %v1384, %v1385
        %v1387 = vsel %vm1004, %v1295, 0.0
        %v1388 = vadd.f32 %v1386, %v1387
        %v1389 = vsel %vm1004, %v1300, 0.0
        %v1390 = vadd.f32 %v1388, %v1389
        %v1391 = vsel %vm1004, %v1303, 0.0
        %v1392 = vadd.f32 %v1390, %v1391
        %v1393 = vsel %vm1004, %v1308, 0.0
        %v1394 = vadd.f32 %v1392, %v1393
        %v1395 = vsel %vm1004, %v1311, 0.0
        %v1396 = vadd.f32 %v1394, %v1395
        %v1397 = vsel %vm1004, %v1316, 0.0
        %v1398 = vadd.f32 %v1396, %v1397
        %v1399 = vsel %vm1004, %v1319, 0.0
        %v1400 = vadd.f32 %v1398, %v1399
        %v1401 = vsel %vm1004, %v1324, 0.0
        %v1402 = vadd.f32 %v1400, %v1401
        %v1403 = vsel %vm1004, %v1327, 0.0
        %v1404 = vadd.f32 %v1402, %v1403
        %v1405 = vsel %vm1004, %v1332, 0.0
        %v1406 = vadd.f32 %v1404, %v1405
        %v1407 = vsel %vm1004, %v1335, 0.0
        %v1408 = vadd.f32 %v1406, %v1407
        %v1409 = vsel %vm1004, %v1340, 0.0
        %v1410 = vadd.f32 %v1408, %v1409
        %v1411 = vsel %vm1004, %v1343, 0.0
        %v1412 = vadd.f32 %v1410, %v1411
        %v1413 = vsel %vm1004, %v1348, 0.0
        %v1414 = vadd.f32 %v1412, %v1413
        %v1415 = vsel %vm1004, %v1351, 0.0
        %v1416 = vadd.f32 %v1414, %v1415
        %v1417 = vrot.slane %v1416, 4
        %v1418 = vadd.f32 %v1416, %v1417
        %v1419 = vrot.slane %v1418, 2
        %v1420 = vadd.f32 %v1418, %v1419
        %v1421 = vrot.slane %v1420, 1
        %v1422 = vadd.f32 %v1420, %v1421
        %v1423 = vmul.f32 %v1422, 0.00390625
        %v1424 = vsub.f32 %v1228, %v1423
        %v1425 = vsub.f32 %v1231, %v1423
        %v1426 = vsub.f32 %v1236, %v1423
        %v1427 = vsub.f32 %v1239, %v1423
        %v1428 = vsub.f32 %v1244, %v1423
        %v1429 = vsub.f32 %v1247, %v1423
        %v1430 = vsub.f32 %v1252, %v1423
        %v1431 = vsub.f32 %v1255, %v1423
        %v1432 = vsub.f32 %v1260, %v1423
        %v1433 = vsub.f32 %v1263, %v1423
        %v1434 = vsub.f32 %v1268, %v1423
        %v1435 = vsub.f32 %v1271, %v1423
        %v1436 = vsub.f32 %v1276, %v1423
        %v1437 = vsub.f32 %v1279, %v1423
        %v1438 = vsub.f32 %v1284, %v1423
        %v1439 = vsub.f32 %v1287, %v1423
        %v1440 = vsub.f32 %v1292, %v1423
        %v1441 = vsub.f32 %v1295, %v1423
        %v1442 = vsub.f32 %v1300, %v1423
        %v1443 = vsub.f32 %v1303, %v1423
        %v1444 = vsub.f32 %v1308, %v1423
        %v1445 = vsub.f32 %v1311, %v1423
        %v1446 = vsub.f32 %v1316, %v1423
        %v1447 = vsub.f32 %v1319, %v1423
        %v1448 = vsub.f32 %v1324, %v1423
        %v1449 = vsub.f32 %v1327, %v1423
        %v1450 = vsub.f32 %v1332, %v1423
        %v1451 = vsub.f32 %v1335, %v1423
        %v1452 = vsub.f32 %v1340, %v1423
        %v1453 = vsub.f32 %v1343, %v1423
        %v1454 = vsub.f32 %v1348, %v1423
        %v1455 = vsub.f32 %v1351, %v1423
        %vm1456 = vcmask 122880
        %1457 = vst.msk [vmem:[%s321] sm:$0x1] %vm1456, %v1422
        %v1458 = vmul.f32 %v1424, %v1424
        %v1459 = vmul.f32 %v1425, %v1425
        %v1460 = vmul.f32 %v1426, %v1426
        %v1461 = vmul.f32 %v1427, %v1427
        %v1462 = vmul.f32 %v1428, %v1428
        %v1463 = vmul.f32 %v1429, %v1429
        %v1464 = vmul.f32 %v1430, %v1430
        %v1465 = vmul.f32 %v1431, %v1431
        %v1466 = vmul.f32 %v1432, %v1432
        %v1467 = vmul.f32 %v1433, %v1433
        %v1468 = vmul.f32 %v1434, %v1434
        %v1469 = vmul.f32 %v1435, %v1435
        %v1470 = vmul.f32 %v1436, %v1436
        %v1471 = vmul.f32 %v1437, %v1437
        %v1472 = vmul.f32 %v1438, %v1438
        %v1473 = vmul.f32 %v1439, %v1439
        %v1474 = vmul.f32 %v1440, %v1440
        %v1475 = vmul.f32 %v1441, %v1441
        %v1476 = vmul.f32 %v1442, %v1442
        %v1477 = vmul.f32 %v1443, %v1443
        %v1478 = vmul.f32 %v1444, %v1444
        %v1479 = vmul.f32 %v1445, %v1445
        %v1480 = vmul.f32 %v1446, %v1446
        %v1481 = vmul.f32 %v1447, %v1447
        %v1482 = vmul.f32 %v1448, %v1448
        %v1483 = vmul.f32 %v1449, %v1449
        %v1484 = vmul.f32 %v1450, %v1450
        %v1485 = vmul.f32 %v1451, %v1451
        %v1486 = vmul.f32 %v1452, %v1452
        %v1487 = vmul.f32 %v1453, %v1453
        %v1488 = vmul.f32 %v1454, %v1454
        %v1489 = vmul.f32 %v1455, %v1455
        %v1490 = vsel %vm1004, %v1458, 0.0
        %v1491 = vsel %vm1004, %v1459, 0.0
        %v1492 = vadd.f32 %v1490, %v1491
        %v1493 = vsel %vm1004, %v1460, 0.0
        %v1494 = vadd.f32 %v1492, %v1493
        %v1495 = vsel %vm1004, %v1461, 0.0
        %v1496 = vadd.f32 %v1494, %v1495
        %v1497 = vsel %vm1004, %v1462, 0.0
        %v1498 = vadd.f32 %v1496, %v1497
        %v1499 = vsel %vm1004, %v1463, 0.0
        %v1500 = vadd.f32 %v1498, %v1499
        %v1501 = vsel %vm1004, %v1464, 0.0
        %v1502 = vadd.f32 %v1500, %v1501
        %v1503 = vsel %vm1004, %v1465, 0.0
        %v1504 = vadd.f32 %v1502, %v1503
        %v1505 = vsel %vm1004, %v1466, 0.0
        %v1506 = vadd.f32 %v1504, %v1505
        %v1507 = vsel %vm1004, %v1467, 0.0
        %v1508 = vadd.f32 %v1506, %v1507
        %v1509 = vsel %vm1004, %v1468, 0.0
        %v1510 = vadd.f32 %v1508, %v1509
        %v1511 = vsel %vm1004, %v1469, 0.0
        %v1512 = vadd.f32 %v1510, %v1511
        %v1513 = vsel %vm1004, %v1470, 0.0
        %v1514 = vadd.f32 %v1512, %v1513
        %v1515 = vsel %vm1004, %v1471, 0.0
        %v1516 = vadd.f32 %v1514, %v1515
        %v1517 = vsel %vm1004, %v1472, 0.0
        %v1518 = vadd.f32 %v1516, %v1517
        %v1519 = vsel %vm1004, %v1473, 0.0
        %v1520 = vadd.f32 %v1518, %v1519
        %v1521 = vsel %vm1004, %v1474, 0.0
        %v1522 = vadd.f32 %v1520, %v1521
        %v1523 = vsel %vm1004, %v1475, 0.0
        %v1524 = vadd.f32 %v1522, %v1523
        %v1525 = vsel %vm1004, %v1476, 0.0
        %v1526 = vadd.f32 %v1524, %v1525
        %v1527 = vsel %vm1004, %v1477, 0.0
        %v1528 = vadd.f32 %v1526, %v1527
        %v1529 = vsel %vm1004, %v1478, 0.0
        %v1530 = vadd.f32 %v1528, %v1529
        %v1531 = vsel %vm1004, %v1479, 0.0
        %v1532 = vadd.f32 %v1530, %v1531
        %v1533 = vsel %vm1004, %v1480, 0.0
        %v1534 = vadd.f32 %v1532, %v1533
        %v1535 = vsel %vm1004, %v1481, 0.0
        %v1536 = vadd.f32 %v1534, %v1535
        %v1537 = vsel %vm1004, %v1482, 0.0
        %v1538 = vadd.f32 %v1536, %v1537
        %v1539 = vsel %vm1004, %v1483, 0.0
        %v1540 = vadd.f32 %v1538, %v1539
        %v1541 = vsel %vm1004, %v1484, 0.0
        %v1542 = vadd.f32 %v1540, %v1541
        %v1543 = vsel %vm1004, %v1485, 0.0
        %v1544 = vadd.f32 %v1542, %v1543
        %v1545 = vsel %vm1004, %v1486, 0.0
        %v1546 = vadd.f32 %v1544, %v1545
        %v1547 = vsel %vm1004, %v1487, 0.0
        %v1548 = vadd.f32 %v1546, %v1547
        %v1549 = vsel %vm1004, %v1488, 0.0
        %v1550 = vadd.f32 %v1548, %v1549
        %v1551 = vsel %vm1004, %v1489, 0.0
        %v1552 = vadd.f32 %v1550, %v1551
        %v1553 = vrot.slane %v1552, 4
        %v1554 = vadd.f32 %v1552, %v1553
        %v1555 = vrot.slane %v1554, 2
        %v1556 = vadd.f32 %v1554, %v1555
        %v1557 = vrot.slane %v1556, 1
        %v1558 = vadd.f32 %v1556, %v1557
        %1559 = vst.msk [vmem:[%s327] sm:$0x1] %vm1456, %v1558
        %v1560 = vpack.c.bf16 %v1231, %v1228
        %v1561 = vpack.c.bf16 %v1239, %v1236
        %v1562 = vpack.c.bf16 %v1247, %v1244
        %v1563 = vpack.c.bf16 %v1255, %v1252
        %v1564 = vpack.c.bf16 %v1263, %v1260
        %v1565 = vpack.c.bf16 %v1271, %v1268
        %v1566 = vpack.c.bf16 %v1279, %v1276
        %v1567 = vpack.c.bf16 %v1287, %v1284
        %v1568 = vpack.c.bf16 %v1295, %v1292
        %v1569 = vpack.c.bf16 %v1303, %v1300
        %v1570 = vpack.c.bf16 %v1311, %v1308
        %v1571 = vpack.c.bf16 %v1319, %v1316
        %v1572 = vpack.c.bf16 %v1327, %v1324
        %v1573 = vpack.c.bf16 %v1335, %v1332
        %v1574 = vpack.c.bf16 %v1343, %v1340
        %v1575 = vpack.c.bf16 %v1351, %v1348
        %v1592 = vunpack.c.l.b16 %v1560
        %v1593 = vunpack.c.h.b16 %v1560
        %v1594 = vunpack.c.l.b16 %v1561
        %v1595 = vunpack.c.h.b16 %v1561
        %v1596 = vunpack.c.l.b16 %v1562
        %v1597 = vunpack.c.h.b16 %v1562
        %v1598 = vunpack.c.l.b16 %v1563
        %v1599 = vunpack.c.h.b16 %v1563
        %v1600 = vunpack.c.l.b16 %v1564
        %v1601 = vunpack.c.h.b16 %v1564
        %v1602 = vunpack.c.l.b16 %v1565
        %v1603 = vunpack.c.h.b16 %v1565
        %v1604 = vunpack.c.l.b16 %v1566
        %v1605 = vunpack.c.h.b16 %v1566
        %v1606 = vunpack.c.l.b16 %v1567
        %v1607 = vunpack.c.h.b16 %v1567
        %v1608 = vunpack.c.l.b16 %v1568
        %v1609 = vunpack.c.h.b16 %v1568
        %v1610 = vunpack.c.l.b16 %v1569
        %v1611 = vunpack.c.h.b16 %v1569
        %v1612 = vunpack.c.l.b16 %v1570
        %v1613 = vunpack.c.h.b16 %v1570
        %v1614 = vunpack.c.l.b16 %v1571
        %v1615 = vunpack.c.h.b16 %v1571
        %v1616 = vunpack.c.l.b16 %v1572
        %v1617 = vunpack.c.h.b16 %v1572
        %v1618 = vunpack.c.l.b16 %v1573
        %v1619 = vunpack.c.h.b16 %v1573
        %v1620 = vunpack.c.l.b16 %v1574
        %v1621 = vunpack.c.h.b16 %v1574
        %v1622 = vunpack.c.l.b16 %v1575
        %v1623 = vunpack.c.h.b16 %v1575
        %v1624 = vpack.c.b16 %v1592, %v1592
        %v1625 = vpack.c.b16 %v1593, %v1593
        %v1626 = vpack.c.b16 %v1594, %v1594
        %v1627 = vpack.c.b16 %v1595, %v1595
        %v1628 = vpack.c.b16 %v1596, %v1596
        %v1629 = vpack.c.b16 %v1597, %v1597
        %v1630 = vpack.c.b16 %v1598, %v1598
        %v1631 = vpack.c.b16 %v1599, %v1599
        %v1632 = vpack.c.b16 %v1600, %v1600
        %v1633 = vpack.c.b16 %v1601, %v1601
        %v1634 = vpack.c.b16 %v1602, %v1602
        %v1635 = vpack.c.b16 %v1603, %v1603
        %v1636 = vpack.c.b16 %v1604, %v1604
        %v1637 = vpack.c.b16 %v1605, %v1605
        %v1638 = vpack.c.b16 %v1606, %v1606
        %v1639 = vpack.c.b16 %v1607, %v1607
        %v1640 = vpack.c.b16 %v1608, %v1608
        %v1641 = vpack.c.b16 %v1609, %v1609
        %v1642 = vpack.c.b16 %v1610, %v1610
        %v1643 = vpack.c.b16 %v1611, %v1611
        %v1644 = vpack.c.b16 %v1612, %v1612
        %v1645 = vpack.c.b16 %v1613, %v1613
        %v1646 = vpack.c.b16 %v1614, %v1614
        %v1647 = vpack.c.b16 %v1615, %v1615
        %v1648 = vpack.c.b16 %v1616, %v1616
        %v1649 = vpack.c.b16 %v1617, %v1617
        %v1650 = vpack.c.b16 %v1618, %v1618
        %v1651 = vpack.c.b16 %v1619, %v1619
        %v1652 = vpack.c.b16 %v1620, %v1620
        %v1653 = vpack.c.b16 %v1621, %v1621
        %v1654 = vpack.c.b16 %v1622, %v1622
        %v1655 = vpack.c.b16 %v1623, %v1623
        %vm1688 = vcmask 60416
        %1689 = vst.msk [vmem:[%s353] sm:$0xf] %vm1688, %v1624
        %1690 = vst.msk [vmem:[%s353 + $0x4] sm:$0xf] %vm1688, %v1625
        %1691 = vst.msk [vmem:[%s353 + $0x8] sm:$0xf] %vm1688, %v1626
        %1692 = vst.msk [vmem:[%s353 + $0xc] sm:$0xf] %vm1688, %v1627
        %1693 = vst.msk [vmem:[%s353 + $0x10] sm:$0xf] %vm1688, %v1628
        %1694 = vst.msk [vmem:[%s353 + $0x14] sm:$0xf] %vm1688, %v1629
        %1695 = vst.msk [vmem:[%s353 + $0x18] sm:$0xf] %vm1688, %v1630
        %1696 = vst.msk [vmem:[%s353 + $0x1c] sm:$0xf] %vm1688, %v1631
        %1697 = vst.msk [vmem:[%s353 + $0x20] sm:$0xf] %vm1688, %v1632
        %1698 = vst.msk [vmem:[%s353 + $0x24] sm:$0xf] %vm1688, %v1633
        %1699 = vst.msk [vmem:[%s353 + $0x28] sm:$0xf] %vm1688, %v1634
        %1700 = vst.msk [vmem:[%s353 + $0x2c] sm:$0xf] %vm1688, %v1635
        %1701 = vst.msk [vmem:[%s353 + $0x30] sm:$0xf] %vm1688, %v1636
        %1702 = vst.msk [vmem:[%s353 + $0x34] sm:$0xf] %vm1688, %v1637
        %1703 = vst.msk [vmem:[%s353 + $0x38] sm:$0xf] %vm1688, %v1638
        %1704 = vst.msk [vmem:[%s353 + $0x3c] sm:$0xf] %vm1688, %v1639
        %1705 = vst.msk [vmem:[%s353 + $0x40] sm:$0xf] %vm1688, %v1640
        %1706 = vst.msk [vmem:[%s353 + $0x44] sm:$0xf] %vm1688, %v1641
        %1707 = vst.msk [vmem:[%s353 + $0x48] sm:$0xf] %vm1688, %v1642
        %1708 = vst.msk [vmem:[%s353 + $0x4c] sm:$0xf] %vm1688, %v1643
        %1709 = vst.msk [vmem:[%s353 + $0x50] sm:$0xf] %vm1688, %v1644
        %1710 = vst.msk [vmem:[%s353 + $0x54] sm:$0xf] %vm1688, %v1645
        %1711 = vst.msk [vmem:[%s353 + $0x58] sm:$0xf] %vm1688, %v1646
        %1712 = vst.msk [vmem:[%s353 + $0x5c] sm:$0xf] %vm1688, %v1647
        %1713 = vst.msk [vmem:[%s353 + $0x60] sm:$0xf] %vm1688, %v1648
        %1714 = vst.msk [vmem:[%s353 + $0x64] sm:$0xf] %vm1688, %v1649
        %1715 = vst.msk [vmem:[%s353 + $0x68] sm:$0xf] %vm1688, %v1650
        %1716 = vst.msk [vmem:[%s353 + $0x6c] sm:$0xf] %vm1688, %v1651
        %1717 = vst.msk [vmem:[%s353 + $0x70] sm:$0xf] %vm1688, %v1652
        %1718 = vst.msk [vmem:[%s353 + $0x74] sm:$0xf] %vm1688, %v1653
        %1719 = vst.msk [vmem:[%s353 + $0x78] sm:$0xf] %vm1688, %v1654
        %1720 = vst.msk [vmem:[%s353 + $0x7c] sm:$0xf] %vm1688, %v1655
        %1721 = vrot.lane.b32.xlu0 %v1624, 120
        %v1722 = vpop.permute.xlu0 %1721
        %1723 = vrot.lane.b32.xlu0 %v1625, 120
        %v1724 = vpop.permute.xlu0 %1723
        %1725 = vrot.lane.b32.xlu0 %v1626, 120
        %v1726 = vpop.permute.xlu0 %1725
        %1727 = vrot.lane.b32.xlu0 %v1627, 120
        %v1728 = vpop.permute.xlu0 %1727
        %1729 = vrot.lane.b32.xlu0 %v1628, 120
        %v1730 = vpop.permute.xlu0 %1729
        %1731 = vrot.lane.b32.xlu0 %v1629, 120
        %v1732 = vpop.permute.xlu0 %1731
        %1733 = vrot.lane.b32.xlu0 %v1630, 120
        %v1734 = vpop.permute.xlu0 %1733
        %1735 = vrot.lane.b32.xlu0 %v1631, 120
        %v1736 = vpop.permute.xlu0 %1735
        %1737 = vrot.lane.b32.xlu0 %v1632, 120
        %v1738 = vpop.permute.xlu0 %1737
        %1739 = vrot.lane.b32.xlu0 %v1633, 120
        %v1740 = vpop.permute.xlu0 %1739
        %1741 = vrot.lane.b32.xlu0 %v1634, 120
        %v1742 = vpop.permute.xlu0 %1741
        %1743 = vrot.lane.b32.xlu0 %v1635, 120
        %v1744 = vpop.permute.xlu0 %1743
        %1745 = vrot.lane.b32.xlu0 %v1636, 120
        %v1746 = vpop.permute.xlu0 %1745
        %1747 = vrot.lane.b32.xlu0 %v1637, 120
        %v1748 = vpop.permute.xlu0 %1747
        %1749 = vrot.lane.b32.xlu0 %v1638, 120
        %v1750 = vpop.permute.xlu0 %1749
        %1751 = vrot.lane.b32.xlu0 %v1639, 120
        %v1752 = vpop.permute.xlu0 %1751
        %1753 = vrot.lane.b32.xlu0 %v1640, 120
        %v1754 = vpop.permute.xlu0 %1753
        %1755 = vrot.lane.b32.xlu0 %v1641, 120
        %v1756 = vpop.permute.xlu0 %1755
        %1757 = vrot.lane.b32.xlu0 %v1642, 120
        %v1758 = vpop.permute.xlu0 %1757
        %1759 = vrot.lane.b32.xlu0 %v1643, 120
        %v1760 = vpop.permute.xlu0 %1759
        %1761 = vrot.lane.b32.xlu0 %v1644, 120
        %v1762 = vpop.permute.xlu0 %1761
        %1763 = vrot.lane.b32.xlu0 %v1645, 120
        %v1764 = vpop.permute.xlu0 %1763
        %1765 = vrot.lane.b32.xlu0 %v1646, 120
        %v1766 = vpop.permute.xlu0 %1765
        %1767 = vrot.lane.b32.xlu0 %v1647, 120
        %v1768 = vpop.permute.xlu0 %1767
        %1769 = vrot.lane.b32.xlu0 %v1648, 120
        %v1770 = vpop.permute.xlu0 %1769
        %1771 = vrot.lane.b32.xlu0 %v1649, 120
        %v1772 = vpop.permute.xlu0 %1771
        %1773 = vrot.lane.b32.xlu0 %v1650, 120
        %v1774 = vpop.permute.xlu0 %1773
        %1775 = vrot.lane.b32.xlu0 %v1651, 120
        %v1776 = vpop.permute.xlu0 %1775
        %1777 = vrot.lane.b32.xlu0 %v1652, 120
        %v1778 = vpop.permute.xlu0 %1777
        %1779 = vrot.lane.b32.xlu0 %v1653, 120
        %v1780 = vpop.permute.xlu0 %1779
        %1781 = vrot.lane.b32.xlu0 %v1654, 120
        %v1782 = vpop.permute.xlu0 %1781
        %1783 = vrot.lane.b32.xlu0 %v1655, 120
        %v1784 = vpop.permute.xlu0 %1783
        %1817 = vst.msk [vmem:[%s361] sm:$0xf] %vm1688, %v1722
        %1818 = vst.msk [vmem:[%s361 + $0x4] sm:$0xf] %vm1688, %v1724
        %1819 = vst.msk [vmem:[%s361 + $0x8] sm:$0xf] %vm1688, %v1726
        %1820 = vst.msk [vmem:[%s361 + $0xc] sm:$0xf] %vm1688, %v1728
        %1821 = vst.msk [vmem:[%s361 + $0x10] sm:$0xf] %vm1688, %v1730
        %1822 = vst.msk [vmem:[%s361 + $0x14] sm:$0xf] %vm1688, %v1732
        %1823 = vst.msk [vmem:[%s361 + $0x18] sm:$0xf] %vm1688, %v1734
        %1824 = vst.msk [vmem:[%s361 + $0x1c] sm:$0xf] %vm1688, %v1736
        %1825 = vst.msk [vmem:[%s361 + $0x20] sm:$0xf] %vm1688, %v1738
        %1826 = vst.msk [vmem:[%s361 + $0x24] sm:$0xf] %vm1688, %v1740
        %1827 = vst.msk [vmem:[%s361 + $0x28] sm:$0xf] %vm1688, %v1742
        %1828 = vst.msk [vmem:[%s361 + $0x2c] sm:$0xf] %vm1688, %v1744
        %1829 = vst.msk [vmem:[%s361 + $0x30] sm:$0xf] %vm1688, %v1746
        %1830 = vst.msk [vmem:[%s361 + $0x34] sm:$0xf] %vm1688, %v1748
        %1831 = vst.msk [vmem:[%s361 + $0x38] sm:$0xf] %vm1688, %v1750
        %1832 = vst.msk [vmem:[%s361 + $0x3c] sm:$0xf] %vm1688, %v1752
        %1833 = vst.msk [vmem:[%s361 + $0x40] sm:$0xf] %vm1688, %v1754
        %1834 = vst.msk [vmem:[%s361 + $0x44] sm:$0xf] %vm1688, %v1756
        %1835 = vst.msk [vmem:[%s361 + $0x48] sm:$0xf] %vm1688, %v1758
        %1836 = vst.msk [vmem:[%s361 + $0x4c] sm:$0xf] %vm1688, %v1760
        %1837 = vst.msk [vmem:[%s361 + $0x50] sm:$0xf] %vm1688, %v1762
        %1838 = vst.msk [vmem:[%s361 + $0x54] sm:$0xf] %vm1688, %v1764
        %1839 = vst.msk [vmem:[%s361 + $0x58] sm:$0xf] %vm1688, %v1766
        %1840 = vst.msk [vmem:[%s361 + $0x5c] sm:$0xf] %vm1688, %v1768
        %1841 = vst.msk [vmem:[%s361 + $0x60] sm:$0xf] %vm1688, %v1770
        %1842 = vst.msk [vmem:[%s361 + $0x64] sm:$0xf] %vm1688, %v1772
        %1843 = vst.msk [vmem:[%s361 + $0x68] sm:$0xf] %vm1688, %v1774
        %1844 = vst.msk [vmem:[%s361 + $0x6c] sm:$0xf] %vm1688, %v1776
        %1845 = vst.msk [vmem:[%s361 + $0x70] sm:$0xf] %vm1688, %v1778
        %1846 = vst.msk [vmem:[%s361 + $0x74] sm:$0xf] %vm1688, %v1780
        %1847 = vst.msk [vmem:[%s361 + $0x78] sm:$0xf] %vm1688, %v1782
        %1848 = vst.msk [vmem:[%s361 + $0x7c] sm:$0xf] %vm1688, %v1784
        %s1849 = sadd.s32 %s28, %s29
        %s1850 = smul.u32 32, %s1849
        %p1851 = scmp.lt.s32.totalorder %s1850, 63
        %s1852 = scalar_select %p1851, %s1850, 63
        %s1853 = smul.addr %s1852, 4
        %s1854 = scalar_lea.vmem %s3, %s1853
        %s1855 = sadd.s32 %s28, %s29
        %s1856 = smul.u32 32, %s1855
        %p1857 = scmp.lt.s32.totalorder %s1856, 63
        %s1858 = scalar_select %p1857, %s1856, 63
        %s1859 = smul.addr %s1858, 4
        %s1860 = scalar_lea.vmem %s4, %s1859
        %s1861 = sand.u32 %s179, 1
        %s1862 = scalar_lea.sflag [#allocation3], %s1861
        %s1863 = sand.u32 %s179, 1
        %s1864 = scalar_lea.vmem [#allocation2], %s1863
        %s1865 = sand.u32 %s207, 1
        %s1866 = scalar_lea.sflag [#allocation5], %s1865
        %s1867 = sand.u32 %s207, 1
        %s1868 = scalar_lea.vmem [#allocation4], %s1867
        // Predicated region
        $region33: #{tpu_custom_call.1} parent=31 // pred_check
          %p1869 = pneg %p133
        $region34: #{tpu_custom_call.1} parent=31 // pred_check_branch
          %1871 = sbr.rel (%p1869) target = $region36
        $region35: #{tpu_custom_call.1} parent=31 // pred_region
          %s1872 = sadd.s32 %s28, %s29
          %s1873 = smul.u32 32, %s1872
        $region36: #{tpu_custom_call.1} parent=31 // pred_fallthru
          _
        // Predicated region
        $region37: #{tpu_custom_call.1} parent=31 // pred_check
          %p1874 = pneg %p161
        $region38: #{tpu_custom_call.1} parent=31 // pred_check_branch
          %1876 = sbr.rel (%p1874) target = $region40
        $region39: #{tpu_custom_call.1} parent=31 // pred_region
          %s1877 = sadd.s32 %s28, %s29
          %s1878 = smul.u32 32, %s1877
        $region40: #{tpu_custom_call.1} parent=31 // pred_fallthru
          _
        // Predicated region
        $region41: #{tpu_custom_call.1} parent=31 // pred_check
          %p1879 = pneg %p189
        $region42: #{tpu_custom_call.1} parent=31 // pred_check_branch
          %1881 = sbr.rel (%p1879) target = $region44
        $region43: #{tpu_custom_call.1} parent=31 // pred_region
          %s1882 = sadd.s32 %s28, %s29
          %s1884 = ssub.s32 16, 16
          %1885 = vsyncadd %s1862, %s1884
          %s1886 = smul.addr %s1882, 16
          %s1887 = scalar_lea.hbm %s5, %s1886
          %s1889 = sshll.u32 %s1864, 4
          %s1890 = int_to_ptr.vmem [resolvable:$true] %s1889
          %1892 = dma.vmem_to_hbm [thread:$0]  %s1890, 16, %s1887, %s1862
        $region44: #{tpu_custom_call.1} parent=31 // pred_fallthru
          _
        // Predicated region
        $region45: #{tpu_custom_call.1} parent=31 // pred_check
          %p1893 = pneg %p217
        $region46: #{tpu_custom_call.1} parent=31 // pred_check_branch
          %1895 = sbr.rel (%p1893) target = $region48
        $region47: #{tpu_custom_call.1} parent=31 // pred_region
          %s1896 = sadd.s32 %s28, %s29
          %s1898 = ssub.s32 16, 16
          %1899 = vsyncadd %s1866, %s1898
          %s1900 = smul.addr %s1896, 16
          %s1901 = scalar_lea.hbm %s6, %s1900
          %s1903 = sshll.u32 %s1868, 4
          %s1904 = int_to_ptr.vmem [resolvable:$true] %s1903
          %1906 = dma.vmem_to_hbm [thread:$0]  %s1904, 16, %s1901, %s1866
        $region48: #{tpu_custom_call.1} parent=31 // pred_fallthru
          _
      $region32: #{tpu_custom_call.1} parent=5 // pred_fallthru
        _
      %p1907 = scmp.le.s32.totalorder 2, %s19
      // Predicated region
      $region49: #{tpu_custom_call.1} parent=5 // pred_check
        %p1908 = pneg %p1907
      $region50: #{tpu_custom_call.1} parent=5 // pred_check_branch
        %1910 = sbr.rel (%p1908) target = $region52
      $region51: #{tpu_custom_call.1} parent=5 // pred_region
        %s1911 = ssub.s32 %s19, 2
        // Predicated region
        $region53: #{tpu_custom_call.1} parent=51 // pred_check
          %p1912 = pneg %p139
        $region54: #{tpu_custom_call.1} parent=51 // pred_check_branch
          %1914 = sbr.rel (%p1912) target = $region56
        $region55: #{tpu_custom_call.1} parent=51 // pred_region
          %s1915 = sadd.s32 %s30, %s31
          %s1916 = smul.u32 32, %s1915
          %p1917 = scmp.lt.s32.totalorder %s1916, 63
          %s1918 = scalar_select %p1917, %s1916, 63
          %s1919 = smul.addr %s1918, 4
          %s1920 = scalar_lea.vmem %s3, %s1919
        $region56: #{tpu_custom_call.1} parent=51 // pred_fallthru
          _
        // Predicated region
        $region57: #{tpu_custom_call.1} parent=51 // pred_check
          %p1921 = pneg %p167
        $region58: #{tpu_custom_call.1} parent=51 // pred_check_branch
          %1923 = sbr.rel (%p1921) target = $region60
        $region59: #{tpu_custom_call.1} parent=51 // pred_region
          %s1924 = sadd.s32 %s30, %s31
          %s1925 = smul.u32 32, %s1924
          %p1926 = scmp.lt.s32.totalorder %s1925, 63
          %s1927 = scalar_select %p1926, %s1925, 63
          %s1928 = smul.addr %s1927, 4
          %s1929 = scalar_lea.vmem %s4, %s1928
        $region60: #{tpu_custom_call.1} parent=51 // pred_fallthru
          _
        // Predicated region
        $region61: #{tpu_custom_call.1} parent=51 // pred_check
          %p1930 = pneg %p195
        $region62: #{tpu_custom_call.1} parent=51 // pred_check_branch
          %1932 = sbr.rel (%p1930) target = $region64
        $region63: #{tpu_custom_call.1} parent=51 // pred_region
          %s1933 = sand.u32 %s180, 1
          %s1934 = scalar_lea.sflag [#allocation3], %s1933
          %s1935 = sand.u32 %s180, 1
          %s1936 = scalar_lea.vmem [#allocation2], %s1935
          %1937 = dma.done %s1934, 16
        $region64: #{tpu_custom_call.1} parent=51 // pred_fallthru
          _
        // Predicated region
        $region65: #{tpu_custom_call.1} parent=51 // pred_check
          %p1938 = pneg %p223
        $region66: #{tpu_custom_call.1} parent=51 // pred_check_branch
          %1940 = sbr.rel (%p1938) target = $region68
        $region67: #{tpu_custom_call.1} parent=51 // pred_region
          %s1941 = sand.u32 %s208, 1
          %s1942 = scalar_lea.sflag [#allocation5], %s1941
          %s1943 = sand.u32 %s208, 1
          %s1944 = scalar_lea.vmem [#allocation4], %s1943
          %1945 = dma.done %s1942, 16
        $region68: #{tpu_custom_call.1} parent=51 // pred_fallthru
          _
      $region52: #{tpu_custom_call.1} parent=5 // pred_fallthru
        _
    $region6: #{tpu_custom_call.1} parent=1 // loop_footer
      %s23 = sadd.s32 1, %s19
    $region7: #{tpu_custom_call.1} parent=1 // loop_footer_branch
      %18 = sbr.rel target = $region3
    $region8: #{tpu_custom_call.1} parent=1 // loop_exit
      _
    %1946 = vsyncpa [#allocation3], 1
    %s1947 = scalar_lea.sflag [#allocation3], 1
    %1948 = vsyncpa %s1947, 1
    %1949 = vsyncpa [#allocation5], 1
    %s1950 = scalar_lea.sflag [#allocation5], 1
    %1951 = vsyncpa %s1950, 1

</llo_original>
